<compile_context>
chip_gen: v5e
topology: v5e:2x2
jax: 0.10.0
libtpu: 0.0.40
codegen_flags: <defaults>
</compile_context>

<pallas_src>
import math
from functools import partial

import jax
import jax.numpy as jnp
from jax.experimental import pallas as pl
from jax.experimental.pallas import tpu as pltpu


# ----------------------------------------------------------------------------
# Fused kernel.  Grid = (batch, layer); batch "parallel", layer "arbitrary".
# ----------------------------------------------------------------------------
def fused_forward_kernel(
        x_ref, w_in_ref, b_in_ref, pe_ref,
        wq_ref, bq_ref, wk_ref, bk_ref, wv_ref, bv_ref,
        wo_ref, bo_ref, ln1g_ref, ln1b_ref,
        w1_ref, b1_ref, w2_ref, b2_ref, ln2g_ref, ln2b_ref,
        wf1_ref, bf1_ref, wf2_ref, bf2_ref,
        o_ref, h_scratch, *, eps):
    l = pl.program_id(1)
    n_layers = pl.num_programs(1)
    H = wq_ref.shape[0]
    S = x_ref.shape[0]
    D = wo_ref.shape[2]
    bf16 = jnp.bfloat16

    # ---- layer step 0: input projection + positional encoding (f32) --------
    # NOTE: h_scratch is written here before the first read below; Pallas
    # guarantees in-trace ordering of stateful ops on the same ref.
    @pl.when(l == 0)
    def _init():
        h_scratch[...] = (
            jnp.dot(x_ref[...], w_in_ref[...],
                    preferred_element_type=jnp.float32)
            + b_in_ref[...] + pe_ref[...])            # pe row broadcast over S

    # ---- encoder layer l (post-LN, ReLU FFN) --------------------------------
    h = h_scratch[...]                                # (S, D) f32
    h3 = jnp.broadcast_to(h.astype(bf16), (H, S, D))  # heads = leading batch dim

    # Per-head projections; weights already bf16, q scale pre-folded host-side.
    q = jnp.einsum('hsd,hdf->hsf', h3, wq_ref[...],
                   preferred_element_type=jnp.float32) + bq_ref[...]
    k = jnp.einsum('hsd,hdf->hsf', h3, wk_ref[...],
                   preferred_element_type=jnp.float32) + bk_ref[...]
    v = jnp.einsum('hsd,hdf->hsf', h3, wv_ref[...],
                   preferred_element_type=jnp.float32) + bv_ref[...]

    # Scaled dot-product attention, batched over heads (no slices / concats).
    s = jnp.einsum('hqd,hkd->hqk', q.astype(bf16), k.astype(bf16),
                   preferred_element_type=jnp.float32)            # (H, S, S)
    s = s - jnp.max(s, axis=-1, keepdims=True)
    p = jnp.exp(s)
    p = p / jnp.sum(p, axis=-1, keepdims=True)        # exact softmax denom
    ctx = jnp.einsum('hqk,hkd->hqd', p.astype(bf16), v.astype(bf16),
                     preferred_element_type=jnp.float32)          # (H, S, hd)

    # Output projection done per head and summed -> no lane concatenation.
    attn = jnp.einsum('hqd,hdf->hqf', ctx.astype(bf16), wo_ref[...],
                      preferred_element_type=jnp.float32)         # (H, S, D)
    attn_out = jnp.sum(attn, axis=0) + bo_ref[...]                # (S, D)

    # residual + LayerNorm 1 (post-norm)
    x1 = h + attn_out
    mu1 = jnp.mean(x1, axis=-1, keepdims=True)
    var1 = jnp.mean((x1 - mu1) ** 2, axis=-1, keepdims=True)
    x1n = (x1 - mu1) * jax.lax.rsqrt(var1 + eps) * ln1g_ref[...] + ln1b_ref[...]

    # feed-forward (ReLU); weights already bf16, accumulate f32
    ff = jnp.maximum(
        jnp.dot(x1n.astype(bf16), w1_ref[...],
                preferred_element_type=jnp.float32) + b1_ref[...], 0.0)
    ff = jnp.dot(ff.astype(bf16), w2_ref[...],
                 preferred_element_type=jnp.float32) + b2_ref[...]

    # residual + LayerNorm 2 (post-norm)
    x2 = x1n + ff
    mu2 = jnp.mean(x2, axis=-1, keepdims=True)
    var2 = jnp.mean((x2 - mu2) ** 2, axis=-1, keepdims=True)
    h_new = (x2 - mu2) * jax.lax.rsqrt(var2 + eps) * ln2g_ref[...] + ln2b_ref[...]
    h_scratch[...] = h_new

    # ---- last layer step: output head on the last time step (f32) ----------
    @pl.when(l == n_layers - 1)
    def _head():
        last = h_new[S - 1:S, :]                                  # (1, D)
        hid = jnp.maximum(
            jnp.dot(last, wf1_ref[...], preferred_element_type=jnp.float32)
            + bf1_ref[...], 0.0)
        o_ref[...] = (jnp.dot(hid, wf2_ref[...],
                              preferred_element_type=jnp.float32)
                      + bf2_ref[...])


# ----------------------------------------------------------------------------
# Wrapper: host-side layout plumbing + pallas_call
# ----------------------------------------------------------------------------
def stock_transformer_forward(x, params):
    B, S, F = x.shape
    D = params["w_in"].shape[1]
    H = params["num_heads"]
    L = params["wqkv"].shape[0]
    Dff = params["w1"].shape[2]
    Dh = params["w_fc1"].shape[1]
    O = params["w_fc2"].shape[1]
    assert D % H == 0, "d_model must be divisible by num_heads"
    assert B <= params["pe"].shape[0], "batch exceeds positional-encoding max_len"
    hd = D // H
    scale = 1.0 / math.sqrt(hd)

    # --- host-side layout plumbing (negligible cost) -------------------------
    # Per-head attention weights with the head axis leading; q scale folded in;
    # all encoder matmul weights pre-cast to bf16 (f32 accumulation in-kernel).
    wqkv, bqkv = params["wqkv"], params["bqkv"]          # (L,D,3D), (L,1,3D)

    def head_w(w):       # (L, D, D) -> (L, H, D, hd)
        return jnp.transpose(w.reshape(L, D, H, hd), (0, 2, 1, 3))

    def head_b(b):       # (L, 1, D) -> (L, H, 1, hd)
        return jnp.transpose(b.reshape(L, 1, H, hd), (0, 2, 1, 3))

    wq = (head_w(wqkv[:, :, :D]) * scale).astype(jnp.bfloat16)
    wk = head_w(wqkv[:, :, D:2 * D]).astype(jnp.bfloat16)
    wv = head_w(wqkv[:, :, 2 * D:]).astype(jnp.bfloat16)
    bq = head_b(bqkv[:, :, :D]) * scale
    bk = head_b(bqkv[:, :, D:2 * D])
    bv = head_b(bqkv[:, :, 2 * D:])
    wo = params["wo"].reshape(L, H, hd, D).astype(jnp.bfloat16)
    w1 = params["w1"].astype(jnp.bfloat16)
    w2 = params["w2"].astype(jnp.bfloat16)

    # Quirky PyTorch PE: row b of the buffer is added to batch element b,
    # broadcast over the sequence axis (batch-first input, pe[:x.size(0)]).
    pe_b = params["pe"][:B][:, None, :]                  # (B, 1, D)

    # --- BlockSpecs ----------------------------------------------------------
    def per_batch(*dims):
        return pl.BlockSpec((None,) + dims, lambda b, l: (b,) + (0,) * len(dims))

    def per_layer(*dims):
        return pl.BlockSpec((None,) + dims, lambda b, l: (l,) + (0,) * len(dims))

    def const(*dims):
        return pl.BlockSpec(dims, lambda b, l: (0,) * len(dims))

    in_specs = [
        per_batch(S, F),          # x          (step-0 only)
        const(F, D),              # w_in       (step-0 only)
        const(1, D),              # b_in       (step-0 only)
        per_batch(1, D),          # pe row b   (step-0 only)
        per_layer(H, D, hd),      # wq  (bf16, scale folded)
        per_layer(H, 1, hd),      # bq  (scale folded)
        per_layer(H, D, hd),      # wk  (bf16)
        per_layer(H, 1, hd),      # bk
        per_layer(H, D, hd),      # wv  (bf16)
        per_layer(H, 1, hd),      # bv
        per_layer(H, hd, D),      # wo  (bf16, per-head rows)
        per_layer(1, D),          # bo
        per_layer(1, D),          # ln1 gamma
        per_layer(1, D),          # ln1 beta
        per_layer(D, Dff),        # w1  (bf16)
        per_layer(1, Dff),        # b1
        per_layer(Dff, D),        # w2  (bf16)
        per_layer(1, D),          # b2
        per_layer(1, D),          # ln2 gamma
        per_layer(1, D),          # ln2 beta
        const(D, Dh),             # w_fc1      (last-step only)
        const(1, Dh),             # b_fc1
        const(Dh, O),             # w_fc2
        const(1, O),              # b_fc2
    ]

    # --- explicit VMEM budget (review item): double-buffered per-layer streams
    # + resident step-0 / step-(L-1) constants + residual-stream scratch.
    # (Does not account for (8,128) tile padding; the 32 MiB floor covers it at
    # these sizes.  Keep under 64 MiB physical on v7x.)
    f4, b2sz = 4, 2
    per_layer_bytes = (3 * H * D * hd * b2sz + 3 * H * hd * f4          # q/k/v
                       + H * hd * D * b2sz + D * f4                     # wo, bo
                       + (D * Dff + Dff * D) * b2sz + (Dff + D) * f4    # ffn
                       + 4 * D * f4)                                    # ln x2
    resident_bytes = ((S * F + F * D + 2 * D                            # x,w_in,b_in,pe
                       + D * Dh + Dh + Dh * O + 2 * O) * f4             # head + out
                      + S * D * f4)                                     # h_scratch
    vmem_limit = 2 * (2 * per_layer_bytes + 2 * resident_bytes)
    vmem_limit = int(max(32 << 20, min(vmem_limit, 128 << 20)))

    kern = partial(fused_forward_kernel, eps=1e-5)

    out = pl.pallas_call(
        kern,
        out_shape=jax.ShapeDtypeStruct((B, 1, O), jnp.float32),
        grid=(B, L),
        in_specs=in_specs,
        out_specs=pl.BlockSpec((None, 1, O), lambda b, l: (b, 0, 0)),
        scratch_shapes=[pltpu.VMEM((S, D), jnp.float32)],
        compiler_params=pltpu.CompilerParams(
            dimension_semantics=("parallel", "arbitrary"),
            vmem_limit_bytes=vmem_limit),
    )(x, params["w_in"], params["b_in"], pe_b,
      wq, bq, wk, bk, wv, bv, wo, params["bo"],
      params["ln1g"], params["ln1b"], w1, params["b1"], w2, params["b2"],
      params["ln2g"], params["ln2b"],
      params["w_fc1"], params["b_fc1"], params["w_fc2"], params["b_fc2"])
    return out.reshape(B, O)


# ----------------------------------------------------------------------------
# Parameters / positional encoding
# ----------------------------------------------------------------------------
def make_positional_encoding(max_len, d_model):
    position = jnp.arange(max_len, dtype=jnp.float32)[:, None]
    div_term = jnp.exp(jnp.arange(0, d_model, 2, dtype=jnp.float32)
                       * (-math.log(10000.0) / d_model))
    pe = jnp.zeros((max_len, d_model), jnp.float32)
    pe = pe.at[:, 0::2].set(jnp.sin(position * div_term))
    pe = pe.at[:, 1::2].set(jnp.cos(position * div_term))
    return pe                                                    # (max_len, D)


def init_params(key, input_size, d_model, num_heads, num_layers,
                dim_feedforward, output_size, max_len=64):
    def dense(k, fan_in, fan_out):
        return (jax.random.normal(k, (fan_in, fan_out), jnp.float32)
                * (1.0 / math.sqrt(fan_in)))

    def vec(k, *shape, scale=0.1, base=0.0):
        return base + scale * jax.random.normal(k, shape, jnp.float32)

    keys = iter(jax.random.split(key, 6 + 12 * num_layers))

    w_in = dense(next(keys), input_size, d_model)
    b_in = vec(next(keys), 1, d_model)
    w_fc1 = dense(next(keys), d_model, d_model // 2)
    b_fc1 = vec(next(keys), 1, d_model // 2)
    w_fc2 = dense(next(keys), d_model // 2, output_size)
    b_fc2 = vec(next(keys), 1, output_size)

    names = ("wqkv", "bqkv", "wo", "bo", "ln1g", "ln1b",
             "w1", "b1", "w2", "b2", "ln2g", "ln2b")
    stacks = {n: [] for n in names}
    for _ in range(num_layers):
        stacks["wqkv"].append(dense(next(keys), d_model, 3 * d_model))
        stacks["bqkv"].append(vec(next(keys), 1, 3 * d_model))
        stacks["wo"].append(dense(next(keys), d_model, d_model))
        stacks["bo"].append(vec(next(keys), 1, d_model))
        stacks["ln1g"].append(vec(next(keys), 1, d_model, base=1.0))
        stacks["ln1b"].append(vec(next(keys), 1, d_model))
        stacks["w1"].append(dense(next(keys), d_model, dim_feedforward))
        stacks["b1"].append(vec(next(keys), 1, dim_feedforward))
        stacks["w2"].append(dense(next(keys), dim_feedforward, d_model))
        stacks["b2"].append(vec(next(keys), 1, d_model))
        stacks["ln2g"].append(vec(next(keys), 1, d_model, base=1.0))
        stacks["ln2b"].append(vec(next(keys), 1, d_model))

    params = {"num_heads": num_heads, "w_in": w_in, "b_in": b_in,
              "pe": make_positional_encoding(max_len, d_model),
              "w_fc1": w_fc1, "b_fc1": b_fc1,
              "w_fc2": w_fc2, "b_fc2": b_fc2}
    params.update({n: jnp.stack(v) for n, v in stacks.items()})
    return params


# ----------------------------------------------------------------------------
# Pure-JAX f32 reference (numerical sanity check)
# ----------------------------------------------------------------------------
def reference_forward(x, params):
    B, S, F = x.shape
    D = params["w_in"].shape[1]
    H = params["num_heads"]
    hd = D // H
    eps = 1e-5

    h = x @ params["w_in"] + params["b_in"] + params["pe"][:B][:, None, :]
    for l in range(params["wqkv"].shape[0]):
        wqkv, bqkv = params["wqkv"][l], params["bqkv"][l]
        wo, bo = params["wo"][l], params["bo"][l]
        g1, be1 = params["ln1g"][l], params["ln1b"][l]
        w1, b1 = params["w1"][l], params["b1"][l]
        w2, b2 = params["w2"][l], params["b2"][l]
        g2, be2 = params["ln2g"][l], params["ln2b"][l]

        qkv = h @ wqkv + bqkv
        q, k, v = qkv[..., :D], qkv[..., D:2 * D], qkv[..., 2 * D:]
        q = q.reshape(B, S, H, hd).transpose(0, 2, 1, 3)
        k = k.reshape(B, S, H, hd).transpose(0, 2, 1, 3)
        v = v.reshape(B, S, H, hd).transpose(0, 2, 1, 3)
        s = jnp.einsum("bhqd,bhkd->bhqk", q, k) / math.sqrt(hd)
        p = jax.nn.softmax(s, axis=-1)
        a = jnp.einsum("bhqk,bhkd->bhqd", p, v).transpose(0, 2, 1, 3).reshape(B, S, D)
        a = a @ wo + bo
        x1 = h + a
        x1 = (x1 - x1.mean(-1, keepdims=True)) / jnp.sqrt(
            x1.var(-1, keepdims=True) + eps) * g1 + be1
        ff = jnp.maximum(x1 @ w1 + b1, 0.0) @ w2 + b2
        x2 = x1 + ff
        h = (x2 - x2.mean(-1, keepdims=True)) / jnp.sqrt(
            x2.var(-1, keepdims=True) + eps) * g2 + be2

    last = h[:, -1, :]
    hid = jnp.maximum(last @ params["w_fc1"] + params["b_fc1"], 0.0)
    return hid @ params["w_fc2"] + params["b_fc2"]


# ----------------------------------------------------------------------------
if __name__ == "__main__":
    B, S = 2, 8
    input_size = 15
    d_model = 32
    num_heads = 4
    num_layers = 2
    dim_feedforward = 64
    output_size = 1

    key = jax.random.PRNGKey(0)
    k_x, k_p = jax.random.split(key)
    x = jax.random.normal(k_x, (B, S, input_size), jnp.float32)
    params = init_params(k_p, input_size, d_model, num_heads, num_layers,
                         dim_feedforward, output_size)

    out = jax.block_until_ready(stock_transformer_forward(x, params))
    assert out.shape == (B, output_size), out.shape

    ref = reference_forward(x, params)
    # Encoder matmuls use bf16 operands (f32 accumulation) -> slightly looser
    # tolerance than a pure-f32 comparison (softmax denom is now exact).
    if not jnp.allclose(out, ref, rtol=3e-2, atol=3e-2):
        raise AssertionError(f"mismatch: pallas={out}, ref={ref}")

    print("KERNEL_OK")
</pallas_src>

<mosaic_0001>
module attributes {stable_mosaic.version = 11 : i64} {
  func.func @fused_forward_kernel(%arg0: i32, %arg1: i32, %arg2: memref<1x8x15xf32, #tpu.memory_space<vmem>>, %arg3: memref<15x32xf32, #tpu.memory_space<vmem>>, %arg4: memref<1x32xf32, #tpu.memory_space<vmem>>, %arg5: memref<1x1x32xf32, #tpu.memory_space<vmem>>, %arg6: memref<1x4x32x8xbf16, #tpu.memory_space<vmem>>, %arg7: memref<1x4x1x8xf32, #tpu.memory_space<vmem>>, %arg8: memref<1x4x32x8xbf16, #tpu.memory_space<vmem>>, %arg9: memref<1x4x1x8xf32, #tpu.memory_space<vmem>>, %arg10: memref<1x4x32x8xbf16, #tpu.memory_space<vmem>>, %arg11: memref<1x4x1x8xf32, #tpu.memory_space<vmem>>, %arg12: memref<1x4x8x32xbf16, #tpu.memory_space<vmem>>, %arg13: memref<1x1x32xf32, #tpu.memory_space<vmem>>, %arg14: memref<1x1x32xf32, #tpu.memory_space<vmem>>, %arg15: memref<1x1x32xf32, #tpu.memory_space<vmem>>, %arg16: memref<1x32x64xbf16, #tpu.memory_space<vmem>>, %arg17: memref<1x1x64xf32, #tpu.memory_space<vmem>>, %arg18: memref<1x64x32xbf16, #tpu.memory_space<vmem>>, %arg19: memref<1x1x32xf32, #tpu.memory_space<vmem>>, %arg20: memref<1x1x32xf32, #tpu.memory_space<vmem>>, %arg21: memref<1x1x32xf32, #tpu.memory_space<vmem>>, %arg22: memref<32x16xf32, #tpu.memory_space<vmem>>, %arg23: memref<1x16xf32, #tpu.memory_space<vmem>>, %arg24: memref<16x1xf32, #tpu.memory_space<vmem>>, %arg25: memref<1x1xf32, #tpu.memory_space<vmem>>, %arg26: memref<1x1x1xf32, #tpu.memory_space<vmem>>, %arg27: memref<8x32xf32, #tpu.memory_space<vmem>>) attributes {dimension_semantics = [#tpu.dimension_semantics<parallel>, #tpu.dimension_semantics<arbitrary>], iteration_bounds = array<i64: 2, 2>, scalar_prefetch = 0 : i64, scratch_operands = 1 : i64, tpu.core_type = #tpu.core_type<tc>, window_params = [{transform_indices = @transform_0, window_bounds = array<i64: 1, 8, 15>}, {pipeline_mode = #tpu.pipeline_mode<synchronous>, transform_indices = @transform_1, window_bounds = array<i64: 15, 32>}, {pipeline_mode = #tpu.pipeline_mode<synchronous>, transform_indices = @transform_2, window_bounds = array<i64: 1, 32>}, {transform_indices = @transform_3, window_bounds = array<i64: 1, 1, 32>}, {transform_indices = @transform_4, window_bounds = array<i64: 1, 4, 32, 8>}, {transform_indices = @transform_5, window_bounds = array<i64: 1, 4, 1, 8>}, {transform_indices = @transform_6, window_bounds = array<i64: 1, 4, 32, 8>}, {transform_indices = @transform_7, window_bounds = array<i64: 1, 4, 1, 8>}, {transform_indices = @transform_8, window_bounds = array<i64: 1, 4, 32, 8>}, {transform_indices = @transform_9, window_bounds = array<i64: 1, 4, 1, 8>}, {transform_indices = @transform_10, window_bounds = array<i64: 1, 4, 8, 32>}, {transform_indices = @transform_11, window_bounds = array<i64: 1, 1, 32>}, {transform_indices = @transform_12, window_bounds = array<i64: 1, 1, 32>}, {transform_indices = @transform_13, window_bounds = array<i64: 1, 1, 32>}, {transform_indices = @transform_14, window_bounds = array<i64: 1, 32, 64>}, {transform_indices = @transform_15, window_bounds = array<i64: 1, 1, 64>}, {transform_indices = @transform_16, window_bounds = array<i64: 1, 64, 32>}, {transform_indices = @transform_17, window_bounds = array<i64: 1, 1, 32>}, {transform_indices = @transform_18, window_bounds = array<i64: 1, 1, 32>}, {transform_indices = @transform_19, window_bounds = array<i64: 1, 1, 32>}, {pipeline_mode = #tpu.pipeline_mode<synchronous>, transform_indices = @transform_20, window_bounds = array<i64: 32, 16>}, {pipeline_mode = #tpu.pipeline_mode<synchronous>, transform_indices = @transform_21, window_bounds = array<i64: 1, 16>}, {pipeline_mode = #tpu.pipeline_mode<synchronous>, transform_indices = @transform_22, window_bounds = array<i64: 16, 1>}, {pipeline_mode = #tpu.pipeline_mode<synchronous>, transform_indices = @transform_23, window_bounds = array<i64: 1, 1>}, {transform_indices = @transform_24, window_bounds = array<i64: 1, 1, 1>}]} {
    %c0_i32 = arith.constant 0 : i32
    %0 = arith.cmpi eq, %arg1, %c0_i32 : i32
    %1 = arith.extui %0 : i1 to i32
    %c0_i32_0 = arith.constant 0 : i32
    %2 = arith.cmpi ne, %1, %c0_i32_0 : i32
    scf.if %2 {
      %c0_81 = arith.constant 0 : index
      %c0_82 = arith.constant 0 : index
      %c0_83 = arith.constant 0 : index
      %128 = vector.load %arg2[%c0_81, %c0_82, %c0_83] : memref<1x8x15xf32, #tpu.memory_space<vmem>>, vector<1x8x15xf32>
      %129 = vector.shape_cast %128 : vector<1x8x15xf32> to vector<8x15xf32>
      %c0_84 = arith.constant 0 : index
      %c0_85 = arith.constant 0 : index
      %130 = vector.load %arg3[%c0_84, %c0_85] : memref<15x32xf32, #tpu.memory_space<vmem>>, vector<15x32xf32>
      %cst_86 = arith.constant dense<0.000000e+00> : vector<8x32xf32>
      %131 = tpu.matmul %129, %130, %cst_86 {dimension_numbers = #tpu.dot_dimension_numbers<[1], [0], [0], [1], [0, 0, 1, 1], [], []>} : vector<8x15xf32>, vector<15x32xf32>, vector<8x32xf32> -> vector<8x32xf32>
      %c0_87 = arith.constant 0 : index
      %c0_88 = arith.constant 0 : index
      %132 = vector.load %arg4[%c0_87, %c0_88] : memref<1x32xf32, #tpu.memory_space<vmem>>, vector<1x32xf32>
      %133 = vector.broadcast %132 : vector<1x32xf32> to vector<8x32xf32>
      %134 = arith.addf %131, %133 : vector<8x32xf32>
      %c0_89 = arith.constant 0 : index
      %c0_90 = arith.constant 0 : index
      %c0_91 = arith.constant 0 : index
      %135 = vector.load %arg5[%c0_89, %c0_90, %c0_91] : memref<1x1x32xf32, #tpu.memory_space<vmem>>, vector<1x1x32xf32>
      %136 = vector.shape_cast %135 : vector<1x1x32xf32> to vector<1x32xf32>
      %137 = vector.broadcast %136 : vector<1x32xf32> to vector<8x32xf32>
      %138 = arith.addf %134, %137 : vector<8x32xf32>
      %c0_92 = arith.constant 0 : index
      %c0_93 = arith.constant 0 : index
      %139 = vector.load %arg27[%c0_92, %c0_93] : memref<8x32xf32, #tpu.memory_space<vmem>>, vector<8x32xf32>
      tpu.vector_store %arg27[%c0_92, %c0_93], %138 {strides = array<i32>} : memref<8x32xf32, #tpu.memory_space<vmem>>, vector<8x32xf32>,
    } else {
    }
    %c0 = arith.constant 0 : index
    %c0_1 = arith.constant 0 : index
    %3 = vector.load %arg27[%c0, %c0_1] : memref<8x32xf32, #tpu.memory_space<vmem>>, vector<8x32xf32>
    %4 = arith.truncf %3 : vector<8x32xf32> to vector<8x32xbf16>
    %5 = vector.shape_cast %4 : vector<8x32xbf16> to vector<1x8x32xbf16>
    %6 = vector.broadcast %5 : vector<1x8x32xbf16> to vector<4x8x32xbf16>
    %c0_2 = arith.constant 0 : index
    %c0_3 = arith.constant 0 : index
    %c0_4 = arith.constant 0 : index
    %c0_5 = arith.constant 0 : index
    %7 = vector.load %arg6[%c0_2, %c0_3, %c0_4, %c0_5] : memref<1x4x32x8xbf16, #tpu.memory_space<vmem>>, vector<1x4x32x8xbf16>
    %8 = vector.shape_cast %7 : vector<1x4x32x8xbf16> to vector<4x32x8xbf16>
    "tpu.trace_start"() <{level = 10 : i32, message = "hsd,hdf->hsf"}> : () -> ()
    %cst = arith.constant dense<0.000000e+00> : vector<4x8x8xf32>
    %9 = tpu.matmul %6, %8, %cst {dimension_numbers = #tpu.dot_dimension_numbers<[2], [1], [1], [2], [0, 0, 0, 1, 1, 2], [0], [0]>} : vector<4x8x32xbf16>, vector<4x32x8xbf16>, vector<4x8x8xf32> -> vector<4x8x8xf32>
    "tpu.trace_stop"() : () -> ()
    %c0_6 = arith.constant 0 : index
    %c0_7 = arith.constant 0 : index
    %c0_8 = arith.constant 0 : index
    %c0_9 = arith.constant 0 : index
    %10 = vector.load %arg7[%c0_6, %c0_7, %c0_8, %c0_9] : memref<1x4x1x8xf32, #tpu.memory_space<vmem>>, vector<1x4x1x8xf32>
    %11 = vector.shape_cast %10 : vector<1x4x1x8xf32> to vector<4x1x8xf32>
    %12 = vector.broadcast %11 : vector<4x1x8xf32> to vector<4x8x8xf32>
    %13 = arith.addf %9, %12 : vector<4x8x8xf32>
    %c0_10 = arith.constant 0 : index
    %c0_11 = arith.constant 0 : index
    %c0_12 = arith.constant 0 : index
    %c0_13 = arith.constant 0 : index
    %14 = vector.load %arg8[%c0_10, %c0_11, %c0_12, %c0_13] : memref<1x4x32x8xbf16, #tpu.memory_space<vmem>>, vector<1x4x32x8xbf16>
    %15 = vector.shape_cast %14 : vector<1x4x32x8xbf16> to vector<4x32x8xbf16>
    "tpu.trace_start"() <{level = 10 : i32, message = "hsd,hdf->hsf"}> : () -> ()
    %cst_14 = arith.constant dense<0.000000e+00> : vector<4x8x8xf32>
    %16 = tpu.matmul %6, %15, %cst_14 {dimension_numbers = #tpu.dot_dimension_numbers<[2], [1], [1], [2], [0, 0, 0, 1, 1, 2], [0], [0]>} : vector<4x8x32xbf16>, vector<4x32x8xbf16>, vector<4x8x8xf32> -> vector<4x8x8xf32>
    "tpu.trace_stop"() : () -> ()
    %c0_15 = arith.constant 0 : index
    %c0_16 = arith.constant 0 : index
    %c0_17 = arith.constant 0 : index
    %c0_18 = arith.constant 0 : index
    %17 = vector.load %arg9[%c0_15, %c0_16, %c0_17, %c0_18] : memref<1x4x1x8xf32, #tpu.memory_space<vmem>>, vector<1x4x1x8xf32>
    %18 = vector.shape_cast %17 : vector<1x4x1x8xf32> to vector<4x1x8xf32>
    %19 = vector.broadcast %18 : vector<4x1x8xf32> to vector<4x8x8xf32>
    %20 = arith.addf %16, %19 : vector<4x8x8xf32>
    %c0_19 = arith.constant 0 : index
    %c0_20 = arith.constant 0 : index
    %c0_21 = arith.constant 0 : index
    %c0_22 = arith.constant 0 : index
    %21 = vector.load %arg10[%c0_19, %c0_20, %c0_21, %c0_22] : memref<1x4x32x8xbf16, #tpu.memory_space<vmem>>, vector<1x4x32x8xbf16>
    %22 = vector.shape_cast %21 : vector<1x4x32x8xbf16> to vector<4x32x8xbf16>
    "tpu.trace_start"() <{level = 10 : i32, message = "hsd,hdf->hsf"}> : () -> ()
    %cst_23 = arith.constant dense<0.000000e+00> : vector<4x8x8xf32>
    %23 = tpu.matmul %6, %22, %cst_23 {dimension_numbers = #tpu.dot_dimension_numbers<[2], [1], [1], [2], [0, 0, 0, 1, 1, 2], [0], [0]>} : vector<4x8x32xbf16>, vector<4x32x8xbf16>, vector<4x8x8xf32> -> vector<4x8x8xf32>
    "tpu.trace_stop"() : () -> ()
    %c0_24 = arith.constant 0 : index
    %c0_25 = arith.constant 0 : index
    %c0_26 = arith.constant 0 : index
    %c0_27 = arith.constant 0 : index
    %24 = vector.load %arg11[%c0_24, %c0_25, %c0_26, %c0_27] : memref<1x4x1x8xf32, #tpu.memory_space<vmem>>, vector<1x4x1x8xf32>
    %25 = vector.shape_cast %24 : vector<1x4x1x8xf32> to vector<4x1x8xf32>
    %26 = vector.broadcast %25 : vector<4x1x8xf32> to vector<4x8x8xf32>
    %27 = arith.addf %23, %26 : vector<4x8x8xf32>
    %28 = arith.truncf %13 : vector<4x8x8xf32> to vector<4x8x8xbf16>
    %29 = arith.truncf %20 : vector<4x8x8xf32> to vector<4x8x8xbf16>
    "tpu.trace_start"() <{level = 10 : i32, message = "hqd,hkd->hqk"}> : () -> ()
    %cst_28 = arith.constant dense<0.000000e+00> : vector<4x8x8xf32>
    %30 = tpu.matmul %28, %29, %cst_28 {dimension_numbers = #tpu.dot_dimension_numbers<[2], [2], [1], [1], [0, 0, 0, 1, 1, 1], [0], [0]>} : vector<4x8x8xbf16>, vector<4x8x8xbf16>, vector<4x8x8xf32> -> vector<4x8x8xf32>
    "tpu.trace_stop"() : () -> ()
    %cst_29 = arith.constant dense<0xFF800000> : vector<4x8xf32>
    %31 = vector.multi_reduction <maximumf>, %30, %cst_29 [2] : vector<4x8x8xf32> to vector<4x8xf32>
    %32 = vector.shape_cast %31 : vector<4x8xf32> to vector<4x8x1xf32>
    %33 = vector.broadcast %32 : vector<4x8x1xf32> to vector<4x8x8xf32>
    %34 = arith.subf %30, %33 : vector<4x8x8xf32>
    %35 = math.exp %34 : vector<4x8x8xf32>
    %cst_30 = arith.constant dense<0.000000e+00> : vector<4x8xf32>
    %36 = vector.multi_reduction <add>, %35, %cst_30 [2] : vector<4x8x8xf32> to vector<4x8xf32>
    %37 = vector.shape_cast %36 : vector<4x8xf32> to vector<4x8x1xf32>
    %38 = vector.broadcast %37 : vector<4x8x1xf32> to vector<4x8x8xf32>
    %39 = arith.divf %35, %38 : vector<4x8x8xf32>
    %40 = arith.truncf %39 : vector<4x8x8xf32> to vector<4x8x8xbf16>
    %41 = arith.truncf %27 : vector<4x8x8xf32> to vector<4x8x8xbf16>
    "tpu.trace_start"() <{level = 10 : i32, message = "hqk,hkd->hqd"}> : () -> ()
    %cst_31 = arith.constant dense<0.000000e+00> : vector<4x8x8xf32>
    %42 = tpu.matmul %40, %41, %cst_31 {dimension_numbers = #tpu.dot_dimension_numbers<[2], [1], [1], [2], [0, 0, 0, 1, 1, 2], [0], [0]>} : vector<4x8x8xbf16>, vector<4x8x8xbf16>, vector<4x8x8xf32> -> vector<4x8x8xf32>
    "tpu.trace_stop"() : () -> ()
    %43 = arith.truncf %42 : vector<4x8x8xf32> to vector<4x8x8xbf16>
    %c0_32 = arith.constant 0 : index
    %c0_33 = arith.constant 0 : index
    %c0_34 = arith.constant 0 : index
    %c0_35 = arith.constant 0 : index
    %44 = vector.load %arg12[%c0_32, %c0_33, %c0_34, %c0_35] : memref<1x4x8x32xbf16, #tpu.memory_space<vmem>>, vector<1x4x8x32xbf16>
    %45 = vector.shape_cast %44 : vector<1x4x8x32xbf16> to vector<4x8x32xbf16>
    "tpu.trace_start"() <{level = 10 : i32, message = "hqd,hdf->hqf"}> : () -> ()
    %cst_36 = arith.constant dense<0.000000e+00> : vector<4x8x32xf32>
    %46 = tpu.matmul %43, %45, %cst_36 {dimension_numbers = #tpu.dot_dimension_numbers<[2], [1], [1], [2], [0, 0, 0, 1, 1, 2], [0], [0]>} : vector<4x8x8xbf16>, vector<4x8x32xbf16>, vector<4x8x32xf32> -> vector<4x8x32xf32>
    "tpu.trace_stop"() : () -> ()
    %cst_37 = arith.constant dense<0.000000e+00> : vector<8x32xf32>
    %47 = vector.multi_reduction <add>, %46, %cst_37 [0] : vector<4x8x32xf32> to vector<8x32xf32>
    %c0_38 = arith.constant 0 : index
    %c0_39 = arith.constant 0 : index
    %c0_40 = arith.constant 0 : index
    %48 = vector.load %arg13[%c0_38, %c0_39, %c0_40] : memref<1x1x32xf32, #tpu.memory_space<vmem>>, vector<1x1x32xf32>
    %49 = vector.shape_cast %48 : vector<1x1x32xf32> to vector<1x32xf32>
    %50 = vector.broadcast %49 : vector<1x32xf32> to vector<8x32xf32>
    %51 = arith.addf %47, %50 : vector<8x32xf32>
    %52 = arith.addf %3, %51 : vector<8x32xf32>
    %cst_41 = arith.constant dense<0.000000e+00> : vector<8xf32>
    %53 = vector.multi_reduction <add>, %52, %cst_41 [1] : vector<8x32xf32> to vector<8xf32>
    %54 = vector.shape_cast %53 : vector<8xf32> to vector<8x1xf32>
    %cst_42 = arith.constant 3.200000e+01 : f32
    %55 = vector.broadcast %cst_42 : f32 to vector<8x1xf32>
    %56 = arith.divf %54, %55 : vector<8x1xf32>
    %57 = vector.broadcast %56 : vector<8x1xf32> to vector<8x32xf32>
    %58 = arith.subf %52, %57 : vector<8x32xf32>
    %59 = arith.mulf %58, %58 : vector<8x32xf32>
    %cst_43 = arith.constant dense<0.000000e+00> : vector<8xf32>
    %60 = vector.multi_reduction <add>, %59, %cst_43 [1] : vector<8x32xf32> to vector<8xf32>
    %61 = vector.shape_cast %60 : vector<8xf32> to vector<8x1xf32>
    %cst_44 = arith.constant 3.200000e+01 : f32
    %62 = vector.broadcast %cst_44 : f32 to vector<8x1xf32>
    %63 = arith.divf %61, %62 : vector<8x1xf32>
    %64 = vector.broadcast %56 : vector<8x1xf32> to vector<8x32xf32>
    %65 = arith.subf %52, %64 : vector<8x32xf32>
    %cst_45 = arith.constant 9.99999974E-6 : f32
    %66 = vector.broadcast %cst_45 : f32 to vector<8x1xf32>
    %67 = arith.addf %63, %66 : vector<8x1xf32>
    %68 = math.rsqrt %67 : vector<8x1xf32>
    %69 = vector.broadcast %68 : vector<8x1xf32> to vector<8x32xf32>
    %70 = arith.mulf %65, %69 : vector<8x32xf32>
    %c0_46 = arith.constant 0 : index
    %c0_47 = arith.constant 0 : index
    %c0_48 = arith.constant 0 : index
    %71 = vector.load %arg14[%c0_46, %c0_47, %c0_48] : memref<1x1x32xf32, #tpu.memory_space<vmem>>, vector<1x1x32xf32>
    %72 = vector.shape_cast %71 : vector<1x1x32xf32> to vector<1x32xf32>
    %73 = vector.broadcast %72 : vector<1x32xf32> to vector<8x32xf32>
    %74 = arith.mulf %70, %73 : vector<8x32xf32>
    %c0_49 = arith.constant 0 : index
    %c0_50 = arith.constant 0 : index
    %c0_51 = arith.constant 0 : index
    %75 = vector.load %arg15[%c0_49, %c0_50, %c0_51] : memref<1x1x32xf32, #tpu.memory_space<vmem>>, vector<1x1x32xf32>
    %76 = vector.shape_cast %75 : vector<1x1x32xf32> to vector<1x32xf32>
    %77 = vector.broadcast %76 : vector<1x32xf32> to vector<8x32xf32>
    %78 = arith.addf %74, %77 : vector<8x32xf32>
    %79 = arith.truncf %78 : vector<8x32xf32> to vector<8x32xbf16>
    %c0_52 = arith.constant 0 : index
    %c0_53 = arith.constant 0 : index
    %c0_54 = arith.constant 0 : index
    %80 = vector.load %arg16[%c0_52, %c0_53, %c0_54] : memref<1x32x64xbf16, #tpu.memory_space<vmem>>, vector<1x32x64xbf16>
    %81 = vector.shape_cast %80 : vector<1x32x64xbf16> to vector<32x64xbf16>
    %cst_55 = arith.constant dense<0.000000e+00> : vector<8x64xf32>
    %82 = tpu.matmul %79, %81, %cst_55 {dimension_numbers = #tpu.dot_dimension_numbers<[1], [0], [0], [1], [0, 0, 1, 1], [], []>} : vector<8x32xbf16>, vector<32x64xbf16>, vector<8x64xf32> -> vector<8x64xf32>
    %c0_56 = arith.constant 0 : index
    %c0_57 = arith.constant 0 : index
    %c0_58 = arith.constant 0 : index
    %83 = vector.load %arg17[%c0_56, %c0_57, %c0_58] : memref<1x1x64xf32, #tpu.memory_space<vmem>>, vector<1x1x64xf32>
    %84 = vector.shape_cast %83 : vector<1x1x64xf32> to vector<1x64xf32>
    %85 = vector.broadcast %84 : vector<1x64xf32> to vector<8x64xf32>
    %86 = arith.addf %82, %85 : vector<8x64xf32>
    %cst_59 = arith.constant 0.000000e+00 : f32
    %87 = vector.broadcast %cst_59 : f32 to vector<8x64xf32>
    %88 = arith.maximumf %86, %87 : vector<8x64xf32>
    %89 = arith.truncf %88 : vector<8x64xf32> to vector<8x64xbf16>
    %c0_60 = arith.constant 0 : index
    %c0_61 = arith.constant 0 : index
    %c0_62 = arith.constant 0 : index
    %90 = vector.load %arg18[%c0_60, %c0_61, %c0_62] : memref<1x64x32xbf16, #tpu.memory_space<vmem>>, vector<1x64x32xbf16>
    %91 = vector.shape_cast %90 : vector<1x64x32xbf16> to vector<64x32xbf16>
    %cst_63 = arith.constant dense<0.000000e+00> : vector<8x32xf32>
    %92 = tpu.matmul %89, %91, %cst_63 {dimension_numbers = #tpu.dot_dimension_numbers<[1], [0], [0], [1], [0, 0, 1, 1], [], []>} : vector<8x64xbf16>, vector<64x32xbf16>, vector<8x32xf32> -> vector<8x32xf32>
    %c0_64 = arith.constant 0 : index
    %c0_65 = arith.constant 0 : index
    %c0_66 = arith.constant 0 : index
    %93 = vector.load %arg19[%c0_64, %c0_65, %c0_66] : memref<1x1x32xf32, #tpu.memory_space<vmem>>, vector<1x1x32xf32>
    %94 = vector.shape_cast %93 : vector<1x1x32xf32> to vector<1x32xf32>
    %95 = vector.broadcast %94 : vector<1x32xf32> to vector<8x32xf32>
    %96 = arith.addf %92, %95 : vector<8x32xf32>
    %97 = arith.addf %78, %96 : vector<8x32xf32>
    %cst_67 = arith.constant dense<0.000000e+00> : vector<8xf32>
    %98 = vector.multi_reduction <add>, %97, %cst_67 [1] : vector<8x32xf32> to vector<8xf32>
    %99 = vector.shape_cast %98 : vector<8xf32> to vector<8x1xf32>
    %cst_68 = arith.constant 3.200000e+01 : f32
    %100 = vector.broadcast %cst_68 : f32 to vector<8x1xf32>
    %101 = arith.divf %99, %100 : vector<8x1xf32>
    %102 = vector.broadcast %101 : vector<8x1xf32> to vector<8x32xf32>
    %103 = arith.subf %97, %102 : vector<8x32xf32>
    %104 = arith.mulf %103, %103 : vector<8x32xf32>
    %cst_69 = arith.constant dense<0.000000e+00> : vector<8xf32>
    %105 = vector.multi_reduction <add>, %104, %cst_69 [1] : vector<8x32xf32> to vector<8xf32>
    %106 = vector.shape_cast %105 : vector<8xf32> to vector<8x1xf32>
    %cst_70 = arith.constant 3.200000e+01 : f32
    %107 = vector.broadcast %cst_70 : f32 to vector<8x1xf32>
    %108 = arith.divf %106, %107 : vector<8x1xf32>
    %109 = vector.broadcast %101 : vector<8x1xf32> to vector<8x32xf32>
    %110 = arith.subf %97, %109 : vector<8x32xf32>
    %cst_71 = arith.constant 9.99999974E-6 : f32
    %111 = vector.broadcast %cst_71 : f32 to vector<8x1xf32>
    %112 = arith.addf %108, %111 : vector<8x1xf32>
    %113 = math.rsqrt %112 : vector<8x1xf32>
    %114 = vector.broadcast %113 : vector<8x1xf32> to vector<8x32xf32>
    %115 = arith.mulf %110, %114 : vector<8x32xf32>
    %c0_72 = arith.constant 0 : index
    %c0_73 = arith.constant 0 : index
    %c0_74 = arith.constant 0 : index
    %116 = vector.load %arg20[%c0_72, %c0_73, %c0_74] : memref<1x1x32xf32, #tpu.memory_space<vmem>>, vector<1x1x32xf32>
    %117 = vector.shape_cast %116 : vector<1x1x32xf32> to vector<1x32xf32>
    %118 = vector.broadcast %117 : vector<1x32xf32> to vector<8x32xf32>
    %119 = arith.mulf %115, %118 : vector<8x32xf32>
    %c0_75 = arith.constant 0 : index
    %c0_76 = arith.constant 0 : index
    %c0_77 = arith.constant 0 : index
    %120 = vector.load %arg21[%c0_75, %c0_76, %c0_77] : memref<1x1x32xf32, #tpu.memory_space<vmem>>, vector<1x1x32xf32>
    %121 = vector.shape_cast %120 : vector<1x1x32xf32> to vector<1x32xf32>
    %122 = vector.broadcast %121 : vector<1x32xf32> to vector<8x32xf32>
    %123 = arith.addf %119, %122 : vector<8x32xf32>
    %c0_78 = arith.constant 0 : index
    %c0_79 = arith.constant 0 : index
    %124 = vector.load %arg27[%c0_78, %c0_79] : memref<8x32xf32, #tpu.memory_space<vmem>>, vector<8x32xf32>
    tpu.vector_store %arg27[%c0_78, %c0_79], %123 {strides = array<i32>} : memref<8x32xf32, #tpu.memory_space<vmem>>, vector<8x32xf32>,
    %c1_i32 = arith.constant 1 : i32
    %125 = arith.cmpi eq, %arg1, %c1_i32 : i32
    %126 = arith.extui %125 : i1 to i32
    %c0_i32_80 = arith.constant 0 : i32
    %127 = arith.cmpi ne, %126, %c0_i32_80 : i32
    scf.if %127 {
      %128 = vector.extract_strided_slice %123 {offsets = [7, 0], sizes = [1, 32], strides = [1, 1]} : vector<8x32xf32> to vector<1x32xf32>
      %c0_81 = arith.constant 0 : index
      %c0_82 = arith.constant 0 : index
      %129 = vector.load %arg22[%c0_81, %c0_82] : memref<32x16xf32, #tpu.memory_space<vmem>>, vector<32x16xf32>
      %cst_83 = arith.constant dense<0.000000e+00> : vector<1x16xf32>
      %130 = tpu.matmul %128, %129, %cst_83 {dimension_numbers = #tpu.dot_dimension_numbers<[1], [0], [0], [1], [0, 0, 1, 1], [], []>} : vector<1x32xf32>, vector<32x16xf32>, vector<1x16xf32> -> vector<1x16xf32>
      %c0_84 = arith.constant 0 : index
      %c0_85 = arith.constant 0 : index
      %131 = vector.load %arg23[%c0_84, %c0_85] : memref<1x16xf32, #tpu.memory_space<vmem>>, vector<1x16xf32>
      %132 = arith.addf %130, %131 : vector<1x16xf32>
      %cst_86 = arith.constant 0.000000e+00 : f32
      %133 = vector.broadcast %cst_86 : f32 to vector<1x16xf32>
      %134 = arith.maximumf %132, %133 : vector<1x16xf32>
      %c0_87 = arith.constant 0 : index
      %c0_88 = arith.constant 0 : index
      %135 = vector.load %arg24[%c0_87, %c0_88] : memref<16x1xf32, #tpu.memory_space<vmem>>, vector<16x1xf32>
      %cst_89 = arith.constant dense<0.000000e+00> : vector<1x1xf32>
      %136 = tpu.matmul %134, %135, %cst_89 {dimension_numbers = #tpu.dot_dimension_numbers<[1], [0], [0], [1], [0, 0, 1, 1], [], []>} : vector<1x16xf32>, vector<16x1xf32>, vector<1x1xf32> -> vector<1x1xf32>
      %c0_90 = arith.constant 0 : index
      %c0_91 = arith.constant 0 : index
      %137 = vector.load %arg25[%c0_90, %c0_91] : memref<1x1xf32, #tpu.memory_space<vmem>>, vector<1x1xf32>
      %138 = arith.addf %136, %137 : vector<1x1xf32>
      %c0_92 = arith.constant 0 : index
      %c0_93 = arith.constant 0 : index
      %c0_94 = arith.constant 0 : index
      %139 = vector.load %arg26[%c0_92, %c0_93, %c0_94] : memref<1x1x1xf32, #tpu.memory_space<vmem>>, vector<1x1x1xf32>
      %140 = vector.shape_cast %139 : vector<1x1x1xf32> to vector<1x1xf32>
      %141 = vector.shape_cast %138 : vector<1x1xf32> to vector<1x1x1xf32>
      tpu.vector_store %arg26[%c0_92, %c0_93, %c0_94], %141 {strides = array<i32>} : memref<1x1x1xf32, #tpu.memory_space<vmem>>, vector<1x1x1xf32>,
    } else {
    }
    return
  }
  func.func @transform_0(%arg0: i32, %arg1: i32) -> (i32, i32, i32) {
    %c0_i32 = arith.constant 0 : i32
    %c0_i32_0 = arith.constant 0 : i32
    %c0_i32_1 = arith.constant 0 : i32
    return %arg0, %c0_i32, %c0_i32_0 : i32, i32, i32
  }
  func.func @transform_1(%arg0: i32, %arg1: i32) -> (i32, i32) {
    %c0_i32 = arith.constant 0 : i32
    %c0_i32_0 = arith.constant 0 : i32
    %c0_i32_1 = arith.constant 0 : i32
    return %c0_i32, %c0_i32_0 : i32, i32
  }
  func.func @transform_2(%arg0: i32, %arg1: i32) -> (i32, i32) {
    %c0_i32 = arith.constant 0 : i32
    %c0_i32_0 = arith.constant 0 : i32
    %c0_i32_1 = arith.constant 0 : i32
    return %c0_i32, %c0_i32_0 : i32, i32
  }
  func.func @transform_3(%arg0: i32, %arg1: i32) -> (i32, i32, i32) {
    %c0_i32 = arith.constant 0 : i32
    %c0_i32_0 = arith.constant 0 : i32
    %c0_i32_1 = arith.constant 0 : i32
    return %arg0, %c0_i32, %c0_i32_0 : i32, i32, i32
  }
  func.func @transform_4(%arg0: i32, %arg1: i32) -> (i32, i32, i32, i32) {
    %c0_i32 = arith.constant 0 : i32
    %c0_i32_0 = arith.constant 0 : i32
    %c0_i32_1 = arith.constant 0 : i32
    %c0_i32_2 = arith.constant 0 : i32
    return %arg1, %c0_i32, %c0_i32_0, %c0_i32_1 : i32, i32, i32, i32
  }
  func.func @transform_5(%arg0: i32, %arg1: i32) -> (i32, i32, i32, i32) {
    %c0_i32 = arith.constant 0 : i32
    %c0_i32_0 = arith.constant 0 : i32
    %c0_i32_1 = arith.constant 0 : i32
    %c0_i32_2 = arith.constant 0 : i32
    return %arg1, %c0_i32, %c0_i32_0, %c0_i32_1 : i32, i32, i32, i32
  }
  func.func @transform_6(%arg0: i32, %arg1: i32) -> (i32, i32, i32, i32) {
    %c0_i32 = arith.constant 0 : i32
    %c0_i32_0 = arith.constant 0 : i32
    %c0_i32_1 = arith.constant 0 : i32
    %c0_i32_2 = arith.constant 0 : i32
    return %arg1, %c0_i32, %c0_i32_0, %c0_i32_1 : i32, i32, i32, i32
  }
  func.func @transform_7(%arg0: i32, %arg1: i32) -> (i32, i32, i32, i32) {
    %c0_i32 = arith.constant 0 : i32
    %c0_i32_0 = arith.constant 0 : i32
    %c0_i32_1 = arith.constant 0 : i32
    %c0_i32_2 = arith.constant 0 : i32
    return %arg1, %c0_i32, %c0_i32_0, %c0_i32_1 : i32, i32, i32, i32
  }
  func.func @transform_8(%arg0: i32, %arg1: i32) -> (i32, i32, i32, i32) {
    %c0_i32 = arith.constant 0 : i32
    %c0_i32_0 = arith.constant 0 : i32
    %c0_i32_1 = arith.constant 0 : i32
    %c0_i32_2 = arith.constant 0 : i32
    return %arg1, %c0_i32, %c0_i32_0, %c0_i32_1 : i32, i32, i32, i32
  }
  func.func @transform_9(%arg0: i32, %arg1: i32) -> (i32, i32, i32, i32) {
    %c0_i32 = arith.constant 0 : i32
    %c0_i32_0 = arith.constant 0 : i32
    %c0_i32_1 = arith.constant 0 : i32
    %c0_i32_2 = arith.constant 0 : i32
    return %arg1, %c0_i32, %c0_i32_0, %c0_i32_1 : i32, i32, i32, i32
  }
  func.func @transform_10(%arg0: i32, %arg1: i32) -> (i32, i32, i32, i32) {
    %c0_i32 = arith.constant 0 : i32
    %c0_i32_0 = arith.constant 0 : i32
    %c0_i32_1 = arith.constant 0 : i32
    %c0_i32_2 = arith.constant 0 : i32
    return %arg1, %c0_i32, %c0_i32_0, %c0_i32_1 : i32, i32, i32, i32
  }
  func.func @transform_11(%arg0: i32, %arg1: i32) -> (i32, i32, i32) {
    %c0_i32 = arith.constant 0 : i32
    %c0_i32_0 = arith.constant 0 : i32
    %c0_i32_1 = arith.constant 0 : i32
    return %arg1, %c0_i32, %c0_i32_0 : i32, i32, i32
  }
  func.func @transform_12(%arg0: i32, %arg1: i32) -> (i32, i32, i32) {
    %c0_i32 = arith.constant 0 : i32
    %c0_i32_0 = arith.constant 0 : i32
    %c0_i32_1 = arith.constant 0 : i32
    return %arg1, %c0_i32, %c0_i32_0 : i32, i32, i32
  }
  func.func @transform_13(%arg0: i32, %arg1: i32) -> (i32, i32, i32) {
    %c0_i32 = arith.constant 0 : i32
    %c0_i32_0 = arith.constant 0 : i32
    %c0_i32_1 = arith.constant 0 : i32
    return %arg1, %c0_i32, %c0_i32_0 : i32, i32, i32
  }
  func.func @transform_14(%arg0: i32, %arg1: i32) -> (i32, i32, i32) {
    %c0_i32 = arith.constant 0 : i32
    %c0_i32_0 = arith.constant 0 : i32
    %c0_i32_1 = arith.constant 0 : i32
    return %arg1, %c0_i32, %c0_i32_0 : i32, i32, i32
  }
  func.func @transform_15(%arg0: i32, %arg1: i32) -> (i32, i32, i32) {
    %c0_i32 = arith.constant 0 : i32
    %c0_i32_0 = arith.constant 0 : i32
    %c0_i32_1 = arith.constant 0 : i32
    return %arg1, %c0_i32, %c0_i32_0 : i32, i32, i32
  }
  func.func @transform_16(%arg0: i32, %arg1: i32) -> (i32, i32, i32) {
    %c0_i32 = arith.constant 0 : i32
    %c0_i32_0 = arith.constant 0 : i32
    %c0_i32_1 = arith.constant 0 : i32
    return %arg1, %c0_i32, %c0_i32_0 : i32, i32, i32
  }
  func.func @transform_17(%arg0: i32, %arg1: i32) -> (i32, i32, i32) {
    %c0_i32 = arith.constant 0 : i32
    %c0_i32_0 = arith.constant 0 : i32
    %c0_i32_1 = arith.constant 0 : i32
    return %arg1, %c0_i32, %c0_i32_0 : i32, i32, i32
  }
  func.func @transform_18(%arg0: i32, %arg1: i32) -> (i32, i32, i32) {
    %c0_i32 = arith.constant 0 : i32
    %c0_i32_0 = arith.constant 0 : i32
    %c0_i32_1 = arith.constant 0 : i32
    return %arg1, %c0_i32, %c0_i32_0 : i32, i32, i32
  }
  func.func @transform_19(%arg0: i32, %arg1: i32) -> (i32, i32, i32) {
    %c0_i32 = arith.constant 0 : i32
    %c0_i32_0 = arith.constant 0 : i32
    %c0_i32_1 = arith.constant 0 : i32
    return %arg1, %c0_i32, %c0_i32_0 : i32, i32, i32
  }
  func.func @transform_20(%arg0: i32, %arg1: i32) -> (i32, i32) {
    %c0_i32 = arith.constant 0 : i32
    %c0_i32_0 = arith.constant 0 : i32
    %c0_i32_1 = arith.constant 0 : i32
    return %c0_i32, %c0_i32_0 : i32, i32
  }
  func.func @transform_21(%arg0: i32, %arg1: i32) -> (i32, i32) {
    %c0_i32 = arith.constant 0 : i32
    %c0_i32_0 = arith.constant 0 : i32
    %c0_i32_1 = arith.constant 0 : i32
    return %c0_i32, %c0_i32_0 : i32, i32
  }
  func.func @transform_22(%arg0: i32, %arg1: i32) -> (i32, i32) {
    %c0_i32 = arith.constant 0 : i32
    %c0_i32_0 = arith.constant 0 : i32
    %c0_i32_1 = arith.constant 0 : i32
    return %c0_i32, %c0_i32_0 : i32, i32
  }
  func.func @transform_23(%arg0: i32, %arg1: i32) -> (i32, i32) {
    %c0_i32 = arith.constant 0 : i32
    %c0_i32_0 = arith.constant 0 : i32
    %c0_i32_1 = arith.constant 0 : i32
    return %c0_i32, %c0_i32_0 : i32, i32
  }
  func.func @transform_24(%arg0: i32, %arg1: i32) -> (i32, i32, i32) {
    %c0_i32 = arith.constant 0 : i32
    %c0_i32_0 = arith.constant 0 : i32
    %c0_i32_1 = arith.constant 0 : i32
    return %arg0, %c0_i32, %c0_i32_0 : i32, i32, i32
  }
}

</mosaic_0001>

<llo_original>
// kernel: tpu_custom_call.1
$region0: #{tpu_custom_call.1}
  #allocation0 [shape = 'u32[]', space=smem, size = 0x4, offset = 0x4, fixed_abs, tag = 'smem constant byte address 0x4 - core index']
  #allocation1 [shape = 'u32[72,128]{1,0:T(1,128)}', space=vmem, size = 0x9000, scoped, tag = 'internal scratch']
  #allocation2 [shape = 'f32[8,32]{1,0:T(8,128)}', space=vmem, size = 0x1000, scoped, tag = 'scratch operand']
  #allocation3 [shape = 'f32[1,1]{1,0:T(1,128)S(1)}', space=vmem, size = 0x200, scoped, tag = 'scoped memory for tpu_custom_call.1']
  %s0 = inlined_call_operand.vmem [shape: f32[2,8,15], index: 0, kind: input, shape index: {}]
  %s1 = inlined_call_operand.vmem [shape: f32[15,32], index: 1, kind: input, shape index: {}]
  %s2 = inlined_call_operand.vmem [shape: f32[1,32], index: 2, kind: input, shape index: {}]
  %s3 = inlined_call_operand.vmem [shape: f32[2,1,32], index: 3, kind: input, shape index: {}]
  %s4 = inlined_call_operand.vmem [shape: bf16[2,4,32,8], index: 4, kind: input, shape index: {}]
  %s5 = inlined_call_operand.vmem [shape: f32[2,4,1,8], index: 5, kind: input, shape index: {}]
  %s6 = inlined_call_operand.vmem [shape: bf16[2,4,32,8], index: 6, kind: input, shape index: {}]
  %s7 = inlined_call_operand.vmem [shape: f32[2,4,1,8], index: 7, kind: input, shape index: {}]
  %s8 = inlined_call_operand.vmem [shape: bf16[2,4,32,8], index: 8, kind: input, shape index: {}]
  %s9 = inlined_call_operand.vmem [shape: f32[2,4,1,8], index: 9, kind: input, shape index: {}]
  %s10 = inlined_call_operand.vmem [shape: bf16[2,4,8,32], index: 10, kind: input, shape index: {}]
  %s11 = inlined_call_operand.vmem [shape: f32[2,1,32], index: 11, kind: input, shape index: {}]
  %s12 = inlined_call_operand.vmem [shape: f32[2,1,32], index: 12, kind: input, shape index: {}]
  %s13 = inlined_call_operand.vmem [shape: f32[2,1,32], index: 13, kind: input, shape index: {}]
  %s14 = inlined_call_operand.vmem [shape: bf16[2,32,64], index: 14, kind: input, shape index: {}]
  %s15 = inlined_call_operand.vmem [shape: f32[2,1,64], index: 15, kind: input, shape index: {}]
  %s16 = inlined_call_operand.vmem [shape: bf16[2,64,32], index: 16, kind: input, shape index: {}]
  %s17 = inlined_call_operand.vmem [shape: f32[2,1,32], index: 17, kind: input, shape index: {}]
  %s18 = inlined_call_operand.vmem [shape: f32[2,1,32], index: 18, kind: input, shape index: {}]
  %s19 = inlined_call_operand.vmem [shape: f32[2,1,32], index: 19, kind: input, shape index: {}]
  %s20 = inlined_call_operand.vmem [shape: f32[32,16], index: 20, kind: input, shape index: {}]
  %s21 = inlined_call_operand.vmem [shape: f32[1,16], index: 21, kind: input, shape index: {}]
  %s22 = inlined_call_operand.vmem [shape: f32[16,1], index: 22, kind: input, shape index: {}]
  %s23 = inlined_call_operand.<no memory space> [shape: f32[1,1], index: 23, kind: input, shape index: {}]
  %s24 = inlined_call_operand.vmem [shape: f32[2,1,1], index: 24, kind: output, shape index: {}]
  %s25 = sld [smem:[#allocation0]]
  $region137: #{tpu_custom_call.1} parent=0
    _
  %s27 = ssub.s32 1, %s25
  %s28 = scalar_select 0, %s27, %s25
  %v29 = vstv %s23
  %30 = vst [vmem:[#allocation3] sm:$0x1] %v29
  loop: start=0, step=1, limit=6
  $region2: #{tpu_custom_call.1} parent=0 // loop_pre_header
    _
  $region3: #{tpu_custom_call.1} parent=0 // loop_header
    %s32 = sphi 0, %s36
    %p33 = scmp.ge.s32.totalorder %s32, 6
    %s39 = sphi 0, %s51
    %s40 = sphi 0, %s47
    %s41 = sphi 0, %s39
    %s42 = sphi 0, %s40
    %s43 = sphi 0, %s41
    %s44 = sphi 0, %s42
    %s54 = sphi 0, %s56
    %s57 = sphi 0, %s54
    %s58 = sphi 0, %s57
    %s74 = sphi 0, %s58
    %s78 = sphi 0, %s78
    %s80 = sphi 0, %s78
    %s81 = sphi 0, %s80
    %s95 = sphi 0, %s81
    %s99 = sphi 0, %s99
    %s101 = sphi 0, %s99
    %s102 = sphi 0, %s101
    %s116 = sphi 0, %s102
    %s122 = sphi 0, %s124
    %s125 = sphi 0, %s122
    %s126 = sphi 0, %s125
    %s142 = sphi 0, %s126
    %s148 = sphi 0, %s150
    %s151 = sphi 0, %s148
    %s152 = sphi 0, %s151
    %s168 = sphi 0, %s152
    %s174 = sphi 0, %s176
    %s177 = sphi 0, %s174
    %s178 = sphi 0, %s177
    %s194 = sphi 0, %s178
    %s200 = sphi 0, %s202
    %s203 = sphi 0, %s200
    %s204 = sphi 0, %s203
    %s220 = sphi 0, %s204
    %s226 = sphi 0, %s228
    %s229 = sphi 0, %s226
    %s230 = sphi 0, %s229
    %s246 = sphi 0, %s230
    %s252 = sphi 0, %s254
    %s255 = sphi 0, %s252
    %s256 = sphi 0, %s255
    %s272 = sphi 0, %s256
    %s278 = sphi 0, %s280
    %s281 = sphi 0, %s278
    %s282 = sphi 0, %s281
    %s298 = sphi 0, %s282
    %s304 = sphi 0, %s306
    %s307 = sphi 0, %s304
    %s308 = sphi 0, %s307
    %s324 = sphi 0, %s308
    %s330 = sphi 0, %s332
    %s333 = sphi 0, %s330
    %s334 = sphi 0, %s333
    %s350 = sphi 0, %s334
    %s356 = sphi 0, %s358
    %s359 = sphi 0, %s356
    %s360 = sphi 0, %s359
    %s376 = sphi 0, %s360
    %s382 = sphi 0, %s384
    %s385 = sphi 0, %s382
    %s386 = sphi 0, %s385
    %s402 = sphi 0, %s386
    %s408 = sphi 0, %s410
    %s411 = sphi 0, %s408
    %s412 = sphi 0, %s411
    %s428 = sphi 0, %s412
    %s434 = sphi 0, %s436
    %s437 = sphi 0, %s434
    %s438 = sphi 0, %s437
    %s454 = sphi 0, %s438
    %s460 = sphi 0, %s462
    %s463 = sphi 0, %s460
    %s464 = sphi 0, %s463
    %s480 = sphi 0, %s464
    %s486 = sphi 0, %s488
    %s489 = sphi 0, %s486
    %s490 = sphi 0, %s489
    %s506 = sphi 0, %s490
    %s512 = sphi 0, %s514
    %s515 = sphi 0, %s512
    %s516 = sphi 0, %s515
    %s532 = sphi 0, %s516
    %s538 = sphi 0, %s540
    %s541 = sphi 0, %s538
    %s542 = sphi 0, %s541
    %s558 = sphi 0, %s542
    %s562 = sphi 0, %s562
    %s564 = sphi 0, %s562
    %s565 = sphi 0, %s564
    %s579 = sphi 0, %s565
    %s583 = sphi 0, %s583
    %s585 = sphi 0, %s583
    %s586 = sphi 0, %s585
    %s600 = sphi 0, %s586
    %s604 = sphi 0, %s604
    %s606 = sphi 0, %s604
    %s607 = sphi 0, %s606
    %s621 = sphi 0, %s607
    %s625 = sphi 0, %s625
    %s627 = sphi 0, %s625
    %s628 = sphi 0, %s627
    %s642 = sphi 0, %s628
    %s648 = sphi 0, %s650
    %s651 = sphi 0, %s648
    %s652 = sphi 0, %s651
    %s668 = sphi 0, %s652
  $region4: #{tpu_custom_call.1} parent=0 // loop_header_branch
    %35 = sbr.rel (%p33) target = $region8
  $region5: #{tpu_custom_call.1} parent=0 // loop_body
    %s37 = ssub.s32 %s32, 1
    %s38 = ssub.s32 %s32, 2
    %s45 = sadd.s32 1, %s40
    %p46 = scmp.ge.s32.totalorder %s45, 2
    %s47 = scalar_select %p46, 0, %s45
    %s48 = sadd.s32 1, %s39
    %s49 = scalar_select %p46, %s48, %s39
    %p50 = scmp.ge.s32.totalorder %s49, 2
    %s51 = scalar_select %p50, 0, %s49
    %s52 = ssub.s32 %s39, %s51
    %p53 = scmp.eq.s32.totalorder %s52, 0
    %s55 = sadd.s32 %s54, 1
    %s56 = scalar_select %p53, %s54, %s55
    %p59 = pneg %p53
    %p60 = scmp.eq.s32.totalorder %s32, 3
    %p61 = por %p59, %p60
    %p62 = scmp.ne.s32.totalorder %s54, %s57
    %p63 = scmp.eq.s32.totalorder %s32, 0
    %p64 = por %p62, %p63
    %p65 = scmp.ne.s32.totalorder %s54, %s57
    %p66 = scmp.eq.s32.totalorder %s37, 3
    %p67 = por %p65, %p66
    %p68 = scmp.ne.s32.totalorder %s57, %s58
    %p69 = scmp.eq.s32.totalorder %s37, 0
    %p70 = por %p68, %p69
    %p71 = scmp.ne.s32.totalorder %s57, %s58
    %p72 = scmp.eq.s32.totalorder %s38, 3
    %p73 = por %p71, %p72
    %p75 = scmp.ne.s32.totalorder %s58, %s74
    %p76 = scmp.eq.s32.totalorder %s38, 0
    %p77 = por %p75, %p76
    %s79 = sadd.s32 %s78, 1
    %p82 = scmp.eq.s32.totalorder %s32, 3
    %p83 = scmp.ne.s32.totalorder %s78, %s80
    %p84 = scmp.eq.s32.totalorder %s32, 0
    %p85 = por %p83, %p84
    %p86 = scmp.ne.s32.totalorder %s78, %s80
    %p87 = scmp.eq.s32.totalorder %s37, 3
    %p88 = por %p86, %p87
    %p89 = scmp.ne.s32.totalorder %s80, %s81
    %p90 = scmp.eq.s32.totalorder %s37, 0
    %p91 = por %p89, %p90
    %p92 = scmp.ne.s32.totalorder %s80, %s81
    %p93 = scmp.eq.s32.totalorder %s38, 3
    %p94 = por %p92, %p93
    %p96 = scmp.ne.s32.totalorder %s81, %s95
    %p97 = scmp.eq.s32.totalorder %s38, 0
    %p98 = por %p96, %p97
    %s100 = sadd.s32 %s99, 1
    %p103 = scmp.eq.s32.totalorder %s32, 3
    %p104 = scmp.ne.s32.totalorder %s99, %s101
    %p105 = scmp.eq.s32.totalorder %s32, 0
    %p106 = por %p104, %p105
    %p107 = scmp.ne.s32.totalorder %s99, %s101
    %p108 = scmp.eq.s32.totalorder %s37, 3
    %p109 = por %p107, %p108
    %p110 = scmp.ne.s32.totalorder %s101, %s102
    %p111 = scmp.eq.s32.totalorder %s37, 0
    %p112 = por %p110, %p111
    %p113 = scmp.ne.s32.totalorder %s101, %s102
    %p114 = scmp.eq.s32.totalorder %s38, 3
    %p115 = por %p113, %p114
    %p117 = scmp.ne.s32.totalorder %s102, %s116
    %p118 = scmp.eq.s32.totalorder %s38, 0
    %p119 = por %p117, %p118
    %s120 = ssub.s32 %s39, %s51
    %p121 = scmp.eq.s32.totalorder %s120, 0
    %s123 = sadd.s32 %s122, 1
    %s124 = scalar_select %p121, %s122, %s123
    %p127 = pneg %p121
    %p128 = scmp.eq.s32.totalorder %s32, 3
    %p129 = por %p127, %p128
    %p130 = scmp.ne.s32.totalorder %s122, %s125
    %p131 = scmp.eq.s32.totalorder %s32, 0
    %p132 = por %p130, %p131
    %p133 = scmp.ne.s32.totalorder %s122, %s125
    %p134 = scmp.eq.s32.totalorder %s37, 3
    %p135 = por %p133, %p134
    %p136 = scmp.ne.s32.totalorder %s125, %s126
    %p137 = scmp.eq.s32.totalorder %s37, 0
    %p138 = por %p136, %p137
    %p139 = scmp.ne.s32.totalorder %s125, %s126
    %p140 = scmp.eq.s32.totalorder %s38, 3
    %p141 = por %p139, %p140
    %p143 = scmp.ne.s32.totalorder %s126, %s142
    %p144 = scmp.eq.s32.totalorder %s38, 0
    %p145 = por %p143, %p144
    %s146 = ssub.s32 %s40, %s47
    %p147 = scmp.eq.s32.totalorder %s146, 0
    %s149 = sadd.s32 %s148, 1
    %s150 = scalar_select %p147, %s148, %s149
    %p153 = pneg %p147
    %p154 = scmp.eq.s32.totalorder %s32, 3
    %p155 = por %p153, %p154
    %p156 = scmp.ne.s32.totalorder %s148, %s151
    %p157 = scmp.eq.s32.totalorder %s32, 0
    %p158 = por %p156, %p157
    %p159 = scmp.ne.s32.totalorder %s148, %s151
    %p160 = scmp.eq.s32.totalorder %s37, 3
    %p161 = por %p159, %p160
    %p162 = scmp.ne.s32.totalorder %s151, %s152
    %p163 = scmp.eq.s32.totalorder %s37, 0
    %p164 = por %p162, %p163
    %p165 = scmp.ne.s32.totalorder %s151, %s152
    %p166 = scmp.eq.s32.totalorder %s38, 3
    %p167 = por %p165, %p166
    %p169 = scmp.ne.s32.totalorder %s152, %s168
    %p170 = scmp.eq.s32.totalorder %s38, 0
    %p171 = por %p169, %p170
    %s172 = ssub.s32 %s40, %s47
    %p173 = scmp.eq.s32.totalorder %s172, 0
    %s175 = sadd.s32 %s174, 1
    %s176 = scalar_select %p173, %s174, %s175
    %p179 = pneg %p173
    %p180 = scmp.eq.s32.totalorder %s32, 3
    %p181 = por %p179, %p180
    %p182 = scmp.ne.s32.totalorder %s174, %s177
    %p183 = scmp.eq.s32.totalorder %s32, 0
    %p184 = por %p182, %p183
    %p185 = scmp.ne.s32.totalorder %s174, %s177
    %p186 = scmp.eq.s32.totalorder %s37, 3
    %p187 = por %p185, %p186
    %p188 = scmp.ne.s32.totalorder %s177, %s178
    %p189 = scmp.eq.s32.totalorder %s37, 0
    %p190 = por %p188, %p189
    %p191 = scmp.ne.s32.totalorder %s177, %s178
    %p192 = scmp.eq.s32.totalorder %s38, 3
    %p193 = por %p191, %p192
    %p195 = scmp.ne.s32.totalorder %s178, %s194
    %p196 = scmp.eq.s32.totalorder %s38, 0
    %p197 = por %p195, %p196
    %s198 = ssub.s32 %s40, %s47
    %p199 = scmp.eq.s32.totalorder %s198, 0
    %s201 = sadd.s32 %s200, 1
    %s202 = scalar_select %p199, %s200, %s201
    %p205 = pneg %p199
    %p206 = scmp.eq.s32.totalorder %s32, 3
    %p207 = por %p205, %p206
    %p208 = scmp.ne.s32.totalorder %s200, %s203
    %p209 = scmp.eq.s32.totalorder %s32, 0
    %p210 = por %p208, %p209
    %p211 = scmp.ne.s32.totalorder %s200, %s203
    %p212 = scmp.eq.s32.totalorder %s37, 3
    %p213 = por %p211, %p212
    %p214 = scmp.ne.s32.totalorder %s203, %s204
    %p215 = scmp.eq.s32.totalorder %s37, 0
    %p216 = por %p214, %p215
    %p217 = scmp.ne.s32.totalorder %s203, %s204
    %p218 = scmp.eq.s32.totalorder %s38, 3
    %p219 = por %p217, %p218
    %p221 = scmp.ne.s32.totalorder %s204, %s220
    %p222 = scmp.eq.s32.totalorder %s38, 0
    %p223 = por %p221, %p222
    %s224 = ssub.s32 %s40, %s47
    %p225 = scmp.eq.s32.totalorder %s224, 0
    %s227 = sadd.s32 %s226, 1
    %s228 = scalar_select %p225, %s226, %s227
    %p231 = pneg %p225
    %p232 = scmp.eq.s32.totalorder %s32, 3
    %p233 = por %p231, %p232
    %p234 = scmp.ne.s32.totalorder %s226, %s229
    %p235 = scmp.eq.s32.totalorder %s32, 0
    %p236 = por %p234, %p235
    %p237 = scmp.ne.s32.totalorder %s226, %s229
    %p238 = scmp.eq.s32.totalorder %s37, 3
    %p239 = por %p237, %p238
    %p240 = scmp.ne.s32.totalorder %s229, %s230
    %p241 = scmp.eq.s32.totalorder %s37, 0
    %p242 = por %p240, %p241
    %p243 = scmp.ne.s32.totalorder %s229, %s230
    %p244 = scmp.eq.s32.totalorder %s38, 3
    %p245 = por %p243, %p244
    %p247 = scmp.ne.s32.totalorder %s230, %s246
    %p248 = scmp.eq.s32.totalorder %s38, 0
    %p249 = por %p247, %p248
    %s250 = ssub.s32 %s40, %s47
    %p251 = scmp.eq.s32.totalorder %s250, 0
    %s253 = sadd.s32 %s252, 1
    %s254 = scalar_select %p251, %s252, %s253
    %p257 = pneg %p251
    %p258 = scmp.eq.s32.totalorder %s32, 3
    %p259 = por %p257, %p258
    %p260 = scmp.ne.s32.totalorder %s252, %s255
    %p261 = scmp.eq.s32.totalorder %s32, 0
    %p262 = por %p260, %p261
    %p263 = scmp.ne.s32.totalorder %s252, %s255
    %p264 = scmp.eq.s32.totalorder %s37, 3
    %p265 = por %p263, %p264
    %p266 = scmp.ne.s32.totalorder %s255, %s256
    %p267 = scmp.eq.s32.totalorder %s37, 0
    %p268 = por %p266, %p267
    %p269 = scmp.ne.s32.totalorder %s255, %s256
    %p270 = scmp.eq.s32.totalorder %s38, 3
    %p271 = por %p269, %p270
    %p273 = scmp.ne.s32.totalorder %s256, %s272
    %p274 = scmp.eq.s32.totalorder %s38, 0
    %p275 = por %p273, %p274
    %s276 = ssub.s32 %s40, %s47
    %p277 = scmp.eq.s32.totalorder %s276, 0
    %s279 = sadd.s32 %s278, 1
    %s280 = scalar_select %p277, %s278, %s279
    %p283 = pneg %p277
    %p284 = scmp.eq.s32.totalorder %s32, 3
    %p285 = por %p283, %p284
    %p286 = scmp.ne.s32.totalorder %s278, %s281
    %p287 = scmp.eq.s32.totalorder %s32, 0
    %p288 = por %p286, %p287
    %p289 = scmp.ne.s32.totalorder %s278, %s281
    %p290 = scmp.eq.s32.totalorder %s37, 3
    %p291 = por %p289, %p290
    %p292 = scmp.ne.s32.totalorder %s281, %s282
    %p293 = scmp.eq.s32.totalorder %s37, 0
    %p294 = por %p292, %p293
    %p295 = scmp.ne.s32.totalorder %s281, %s282
    %p296 = scmp.eq.s32.totalorder %s38, 3
    %p297 = por %p295, %p296
    %p299 = scmp.ne.s32.totalorder %s282, %s298
    %p300 = scmp.eq.s32.totalorder %s38, 0
    %p301 = por %p299, %p300
    %s302 = ssub.s32 %s40, %s47
    %p303 = scmp.eq.s32.totalorder %s302, 0
    %s305 = sadd.s32 %s304, 1
    %s306 = scalar_select %p303, %s304, %s305
    %p309 = pneg %p303
    %p310 = scmp.eq.s32.totalorder %s32, 3
    %p311 = por %p309, %p310
    %p312 = scmp.ne.s32.totalorder %s304, %s307
    %p313 = scmp.eq.s32.totalorder %s32, 0
    %p314 = por %p312, %p313
    %p315 = scmp.ne.s32.totalorder %s304, %s307
    %p316 = scmp.eq.s32.totalorder %s37, 3
    %p317 = por %p315, %p316
    %p318 = scmp.ne.s32.totalorder %s307, %s308
    %p319 = scmp.eq.s32.totalorder %s37, 0
    %p320 = por %p318, %p319
    %p321 = scmp.ne.s32.totalorder %s307, %s308
    %p322 = scmp.eq.s32.totalorder %s38, 3
    %p323 = por %p321, %p322
    %p325 = scmp.ne.s32.totalorder %s308, %s324
    %p326 = scmp.eq.s32.totalorder %s38, 0
    %p327 = por %p325, %p326
    %s328 = ssub.s32 %s40, %s47
    %p329 = scmp.eq.s32.totalorder %s328, 0
    %s331 = sadd.s32 %s330, 1
    %s332 = scalar_select %p329, %s330, %s331
    %p335 = pneg %p329
    %p336 = scmp.eq.s32.totalorder %s32, 3
    %p337 = por %p335, %p336
    %p338 = scmp.ne.s32.totalorder %s330, %s333
    %p339 = scmp.eq.s32.totalorder %s32, 0
    %p340 = por %p338, %p339
    %p341 = scmp.ne.s32.totalorder %s330, %s333
    %p342 = scmp.eq.s32.totalorder %s37, 3
    %p343 = por %p341, %p342
    %p344 = scmp.ne.s32.totalorder %s333, %s334
    %p345 = scmp.eq.s32.totalorder %s37, 0
    %p346 = por %p344, %p345
    %p347 = scmp.ne.s32.totalorder %s333, %s334
    %p348 = scmp.eq.s32.totalorder %s38, 3
    %p349 = por %p347, %p348
    %p351 = scmp.ne.s32.totalorder %s334, %s350
    %p352 = scmp.eq.s32.totalorder %s38, 0
    %p353 = por %p351, %p352
    %s354 = ssub.s32 %s40, %s47
    %p355 = scmp.eq.s32.totalorder %s354, 0
    %s357 = sadd.s32 %s356, 1
    %s358 = scalar_select %p355, %s356, %s357
    %p361 = pneg %p355
    %p362 = scmp.eq.s32.totalorder %s32, 3
    %p363 = por %p361, %p362
    %p364 = scmp.ne.s32.totalorder %s356, %s359
    %p365 = scmp.eq.s32.totalorder %s32, 0
    %p366 = por %p364, %p365
    %p367 = scmp.ne.s32.totalorder %s356, %s359
    %p368 = scmp.eq.s32.totalorder %s37, 3
    %p369 = por %p367, %p368
    %p370 = scmp.ne.s32.totalorder %s359, %s360
    %p371 = scmp.eq.s32.totalorder %s37, 0
    %p372 = por %p370, %p371
    %p373 = scmp.ne.s32.totalorder %s359, %s360
    %p374 = scmp.eq.s32.totalorder %s38, 3
    %p375 = por %p373, %p374
    %p377 = scmp.ne.s32.totalorder %s360, %s376
    %p378 = scmp.eq.s32.totalorder %s38, 0
    %p379 = por %p377, %p378
    %s380 = ssub.s32 %s40, %s47
    %p381 = scmp.eq.s32.totalorder %s380, 0
    %s383 = sadd.s32 %s382, 1
    %s384 = scalar_select %p381, %s382, %s383
    %p387 = pneg %p381
    %p388 = scmp.eq.s32.totalorder %s32, 3
    %p389 = por %p387, %p388
    %p390 = scmp.ne.s32.totalorder %s382, %s385
    %p391 = scmp.eq.s32.totalorder %s32, 0
    %p392 = por %p390, %p391
    %p393 = scmp.ne.s32.totalorder %s382, %s385
    %p394 = scmp.eq.s32.totalorder %s37, 3
    %p395 = por %p393, %p394
    %p396 = scmp.ne.s32.totalorder %s385, %s386
    %p397 = scmp.eq.s32.totalorder %s37, 0
    %p398 = por %p396, %p397
    %p399 = scmp.ne.s32.totalorder %s385, %s386
    %p400 = scmp.eq.s32.totalorder %s38, 3
    %p401 = por %p399, %p400
    %p403 = scmp.ne.s32.totalorder %s386, %s402
    %p404 = scmp.eq.s32.totalorder %s38, 0
    %p405 = por %p403, %p404
    %s406 = ssub.s32 %s40, %s47
    %p407 = scmp.eq.s32.totalorder %s406, 0
    %s409 = sadd.s32 %s408, 1
    %s410 = scalar_select %p407, %s408, %s409
    %p413 = pneg %p407
    %p414 = scmp.eq.s32.totalorder %s32, 3
    %p415 = por %p413, %p414
    %p416 = scmp.ne.s32.totalorder %s408, %s411
    %p417 = scmp.eq.s32.totalorder %s32, 0
    %p418 = por %p416, %p417
    %p419 = scmp.ne.s32.totalorder %s408, %s411
    %p420 = scmp.eq.s32.totalorder %s37, 3
    %p421 = por %p419, %p420
    %p422 = scmp.ne.s32.totalorder %s411, %s412
    %p423 = scmp.eq.s32.totalorder %s37, 0
    %p424 = por %p422, %p423
    %p425 = scmp.ne.s32.totalorder %s411, %s412
    %p426 = scmp.eq.s32.totalorder %s38, 3
    %p427 = por %p425, %p426
    %p429 = scmp.ne.s32.totalorder %s412, %s428
    %p430 = scmp.eq.s32.totalorder %s38, 0
    %p431 = por %p429, %p430
    %s432 = ssub.s32 %s40, %s47
    %p433 = scmp.eq.s32.totalorder %s432, 0
    %s435 = sadd.s32 %s434, 1
    %s436 = scalar_select %p433, %s434, %s435
    %p439 = pneg %p433
    %p440 = scmp.eq.s32.totalorder %s32, 3
    %p441 = por %p439, %p440
    %p442 = scmp.ne.s32.totalorder %s434, %s437
    %p443 = scmp.eq.s32.totalorder %s32, 0
    %p444 = por %p442, %p443
    %p445 = scmp.ne.s32.totalorder %s434, %s437
    %p446 = scmp.eq.s32.totalorder %s37, 3
    %p447 = por %p445, %p446
    %p448 = scmp.ne.s32.totalorder %s437, %s438
    %p449 = scmp.eq.s32.totalorder %s37, 0
    %p450 = por %p448, %p449
    %p451 = scmp.ne.s32.totalorder %s437, %s438
    %p452 = scmp.eq.s32.totalorder %s38, 3
    %p453 = por %p451, %p452
    %p455 = scmp.ne.s32.totalorder %s438, %s454
    %p456 = scmp.eq.s32.totalorder %s38, 0
    %p457 = por %p455, %p456
    %s458 = ssub.s32 %s40, %s47
    %p459 = scmp.eq.s32.totalorder %s458, 0
    %s461 = sadd.s32 %s460, 1
    %s462 = scalar_select %p459, %s460, %s461
    %p465 = pneg %p459
    %p466 = scmp.eq.s32.totalorder %s32, 3
    %p467 = por %p465, %p466
    %p468 = scmp.ne.s32.totalorder %s460, %s463
    %p469 = scmp.eq.s32.totalorder %s32, 0
    %p470 = por %p468, %p469
    %p471 = scmp.ne.s32.totalorder %s460, %s463
    %p472 = scmp.eq.s32.totalorder %s37, 3
    %p473 = por %p471, %p472
    %p474 = scmp.ne.s32.totalorder %s463, %s464
    %p475 = scmp.eq.s32.totalorder %s37, 0
    %p476 = por %p474, %p475
    %p477 = scmp.ne.s32.totalorder %s463, %s464
    %p478 = scmp.eq.s32.totalorder %s38, 3
    %p479 = por %p477, %p478
    %p481 = scmp.ne.s32.totalorder %s464, %s480
    %p482 = scmp.eq.s32.totalorder %s38, 0
    %p483 = por %p481, %p482
    %s484 = ssub.s32 %s40, %s47
    %p485 = scmp.eq.s32.totalorder %s484, 0
    %s487 = sadd.s32 %s486, 1
    %s488 = scalar_select %p485, %s486, %s487
    %p491 = pneg %p485
    %p492 = scmp.eq.s32.totalorder %s32, 3
    %p493 = por %p491, %p492
    %p494 = scmp.ne.s32.totalorder %s486, %s489
    %p495 = scmp.eq.s32.totalorder %s32, 0
    %p496 = por %p494, %p495
    %p497 = scmp.ne.s32.totalorder %s486, %s489
    %p498 = scmp.eq.s32.totalorder %s37, 3
    %p499 = por %p497, %p498
    %p500 = scmp.ne.s32.totalorder %s489, %s490
    %p501 = scmp.eq.s32.totalorder %s37, 0
    %p502 = por %p500, %p501
    %p503 = scmp.ne.s32.totalorder %s489, %s490
    %p504 = scmp.eq.s32.totalorder %s38, 3
    %p505 = por %p503, %p504
    %p507 = scmp.ne.s32.totalorder %s490, %s506
    %p508 = scmp.eq.s32.totalorder %s38, 0
    %p509 = por %p507, %p508
    %s510 = ssub.s32 %s40, %s47
    %p511 = scmp.eq.s32.totalorder %s510, 0
    %s513 = sadd.s32 %s512, 1
    %s514 = scalar_select %p511, %s512, %s513
    %p517 = pneg %p511
    %p518 = scmp.eq.s32.totalorder %s32, 3
    %p519 = por %p517, %p518
    %p520 = scmp.ne.s32.totalorder %s512, %s515
    %p521 = scmp.eq.s32.totalorder %s32, 0
    %p522 = por %p520, %p521
    %p523 = scmp.ne.s32.totalorder %s512, %s515
    %p524 = scmp.eq.s32.totalorder %s37, 3
    %p525 = por %p523, %p524
    %p526 = scmp.ne.s32.totalorder %s515, %s516
    %p527 = scmp.eq.s32.totalorder %s37, 0
    %p528 = por %p526, %p527
    %p529 = scmp.ne.s32.totalorder %s515, %s516
    %p530 = scmp.eq.s32.totalorder %s38, 3
    %p531 = por %p529, %p530
    %p533 = scmp.ne.s32.totalorder %s516, %s532
    %p534 = scmp.eq.s32.totalorder %s38, 0
    %p535 = por %p533, %p534
    %s536 = ssub.s32 %s40, %s47
    %p537 = scmp.eq.s32.totalorder %s536, 0
    %s539 = sadd.s32 %s538, 1
    %s540 = scalar_select %p537, %s538, %s539
    %p543 = pneg %p537
    %p544 = scmp.eq.s32.totalorder %s32, 3
    %p545 = por %p543, %p544
    %p546 = scmp.ne.s32.totalorder %s538, %s541
    %p547 = scmp.eq.s32.totalorder %s32, 0
    %p548 = por %p546, %p547
    %p549 = scmp.ne.s32.totalorder %s538, %s541
    %p550 = scmp.eq.s32.totalorder %s37, 3
    %p551 = por %p549, %p550
    %p552 = scmp.ne.s32.totalorder %s541, %s542
    %p553 = scmp.eq.s32.totalorder %s37, 0
    %p554 = por %p552, %p553
    %p555 = scmp.ne.s32.totalorder %s541, %s542
    %p556 = scmp.eq.s32.totalorder %s38, 3
    %p557 = por %p555, %p556
    %p559 = scmp.ne.s32.totalorder %s542, %s558
    %p560 = scmp.eq.s32.totalorder %s38, 0
    %p561 = por %p559, %p560
    %s563 = sadd.s32 %s562, 1
    %p566 = scmp.eq.s32.totalorder %s32, 3
    %p567 = scmp.ne.s32.totalorder %s562, %s564
    %p568 = scmp.eq.s32.totalorder %s32, 0
    %p569 = por %p567, %p568
    %p570 = scmp.ne.s32.totalorder %s562, %s564
    %p571 = scmp.eq.s32.totalorder %s37, 3
    %p572 = por %p570, %p571
    %p573 = scmp.ne.s32.totalorder %s564, %s565
    %p574 = scmp.eq.s32.totalorder %s37, 0
    %p575 = por %p573, %p574
    %p576 = scmp.ne.s32.totalorder %s564, %s565
    %p577 = scmp.eq.s32.totalorder %s38, 3
    %p578 = por %p576, %p577
    %p580 = scmp.ne.s32.totalorder %s565, %s579
    %p581 = scmp.eq.s32.totalorder %s38, 0
    %p582 = por %p580, %p581
    %s584 = sadd.s32 %s583, 1
    %p587 = scmp.eq.s32.totalorder %s32, 3
    %p588 = scmp.ne.s32.totalorder %s583, %s585
    %p589 = scmp.eq.s32.totalorder %s32, 0
    %p590 = por %p588, %p589
    %p591 = scmp.ne.s32.totalorder %s583, %s585
    %p592 = scmp.eq.s32.totalorder %s37, 3
    %p593 = por %p591, %p592
    %p594 = scmp.ne.s32.totalorder %s585, %s586
    %p595 = scmp.eq.s32.totalorder %s37, 0
    %p596 = por %p594, %p595
    %p597 = scmp.ne.s32.totalorder %s585, %s586
    %p598 = scmp.eq.s32.totalorder %s38, 3
    %p599 = por %p597, %p598
    %p601 = scmp.ne.s32.totalorder %s586, %s600
    %p602 = scmp.eq.s32.totalorder %s38, 0
    %p603 = por %p601, %p602
    %s605 = sadd.s32 %s604, 1
    %p608 = scmp.eq.s32.totalorder %s32, 3
    %p609 = scmp.ne.s32.totalorder %s604, %s606
    %p610 = scmp.eq.s32.totalorder %s32, 0
    %p611 = por %p609, %p610
    %p612 = scmp.ne.s32.totalorder %s604, %s606
    %p613 = scmp.eq.s32.totalorder %s37, 3
    %p614 = por %p612, %p613
    %p615 = scmp.ne.s32.totalorder %s606, %s607
    %p616 = scmp.eq.s32.totalorder %s37, 0
    %p617 = por %p615, %p616
    %p618 = scmp.ne.s32.totalorder %s606, %s607
    %p619 = scmp.eq.s32.totalorder %s38, 3
    %p620 = por %p618, %p619
    %p622 = scmp.ne.s32.totalorder %s607, %s621
    %p623 = scmp.eq.s32.totalorder %s38, 0
    %p624 = por %p622, %p623
    %s626 = sadd.s32 %s625, 1
    %p629 = scmp.eq.s32.totalorder %s32, 3
    %p630 = scmp.ne.s32.totalorder %s625, %s627
    %p631 = scmp.eq.s32.totalorder %s32, 0
    %p632 = por %p630, %p631
    %p633 = scmp.ne.s32.totalorder %s625, %s627
    %p634 = scmp.eq.s32.totalorder %s37, 3
    %p635 = por %p633, %p634
    %p636 = scmp.ne.s32.totalorder %s627, %s628
    %p637 = scmp.eq.s32.totalorder %s37, 0
    %p638 = por %p636, %p637
    %p639 = scmp.ne.s32.totalorder %s627, %s628
    %p640 = scmp.eq.s32.totalorder %s38, 3
    %p641 = por %p639, %p640
    %p643 = scmp.ne.s32.totalorder %s628, %s642
    %p644 = scmp.eq.s32.totalorder %s38, 0
    %p645 = por %p643, %p644
    %s646 = ssub.s32 %s39, %s51
    %p647 = scmp.eq.s32.totalorder %s646, 0
    %s649 = sadd.s32 %s648, 1
    %s650 = scalar_select %p647, %s648, %s649
    %p653 = pneg %p647
    %p654 = scmp.eq.s32.totalorder %s32, 3
    %p655 = por %p653, %p654
    %p656 = scmp.ne.s32.totalorder %s648, %s651
    %p657 = scmp.eq.s32.totalorder %s32, 0
    %p658 = por %p656, %p657
    %p659 = scmp.ne.s32.totalorder %s648, %s651
    %p660 = scmp.eq.s32.totalorder %s37, 3
    %p661 = por %p659, %p660
    %p662 = scmp.ne.s32.totalorder %s651, %s652
    %p663 = scmp.eq.s32.totalorder %s37, 0
    %p664 = por %p662, %p663
    %p665 = scmp.ne.s32.totalorder %s651, %s652
    %p666 = scmp.eq.s32.totalorder %s38, 3
    %p667 = por %p665, %p666
    %p669 = scmp.ne.s32.totalorder %s652, %s668
    %p670 = scmp.eq.s32.totalorder %s38, 0
    %p671 = por %p669, %p670
    %p672 = scmp.le.s32.totalorder 1, %s32
    %p673 = scmp.lt.s32.totalorder %s32, 5
    %p674 = pnand %p672, %p673
    %p675 = pneg %p674
    // Predicated region
    $region9: #{tpu_custom_call.1} parent=5 // pred_check
      _
    $region10: #{tpu_custom_call.1} parent=5 // pred_check_branch
      %677 = sbr.rel (%p674) target = $region12
    $region11: #{tpu_custom_call.1} parent=5 // pred_region
      %s678 = ssub.s32 %s32, 1
      // Predicated region
      $region13: #{tpu_custom_call.1} parent=11 // pred_check
        %p679 = pneg %p91
      $region14: #{tpu_custom_call.1} parent=11 // pred_check_branch
        %681 = sbr.rel (%p679) target = $region16
      $region15: #{tpu_custom_call.1} parent=11 // pred_region
        _
      $region16: #{tpu_custom_call.1} parent=11 // pred_fallthru
        _
      // Predicated region
      $region17: #{tpu_custom_call.1} parent=11 // pred_check
        %p682 = pneg %p112
      $region18: #{tpu_custom_call.1} parent=11 // pred_check_branch
        %684 = sbr.rel (%p682) target = $region20
      $region19: #{tpu_custom_call.1} parent=11 // pred_region
        _
      $region20: #{tpu_custom_call.1} parent=11 // pred_fallthru
        _
      // Predicated region
      $region21: #{tpu_custom_call.1} parent=11 // pred_check
        %p685 = pneg %p575
      $region22: #{tpu_custom_call.1} parent=11 // pred_check_branch
        %687 = sbr.rel (%p685) target = $region24
      $region23: #{tpu_custom_call.1} parent=11 // pred_region
        _
      $region24: #{tpu_custom_call.1} parent=11 // pred_fallthru
        _
      // Predicated region
      $region25: #{tpu_custom_call.1} parent=11 // pred_check
        %p688 = pneg %p596
      $region26: #{tpu_custom_call.1} parent=11 // pred_check_branch
        %690 = sbr.rel (%p688) target = $region28
      $region27: #{tpu_custom_call.1} parent=11 // pred_region
        _
      $region28: #{tpu_custom_call.1} parent=11 // pred_fallthru
        _
      // Predicated region
      $region29: #{tpu_custom_call.1} parent=11 // pred_check
        %p691 = pneg %p617
      $region30: #{tpu_custom_call.1} parent=11 // pred_check_branch
        %693 = sbr.rel (%p691) target = $region32
      $region31: #{tpu_custom_call.1} parent=11 // pred_region
        _
      $region32: #{tpu_custom_call.1} parent=11 // pred_fallthru
        _
      // Predicated region
      $region33: #{tpu_custom_call.1} parent=11 // pred_check
        %p694 = pneg %p638
      $region34: #{tpu_custom_call.1} parent=11 // pred_check_branch
        %696 = sbr.rel (%p694) target = $region36
      $region35: #{tpu_custom_call.1} parent=11 // pred_region
        _
      $region36: #{tpu_custom_call.1} parent=11 // pred_fallthru
        _
    $region12: #{tpu_custom_call.1} parent=5 // pred_fallthru
      _
    %p697 = scmp.lt.s32.totalorder %s32, 4
    // Predicated region
    $region37: #{tpu_custom_call.1} parent=5 // pred_check
      %p698 = pneg %p697
    $region38: #{tpu_custom_call.1} parent=5 // pred_check_branch
      %700 = sbr.rel (%p698) target = $region40
    $region39: #{tpu_custom_call.1} parent=5 // pred_region
      // Predicated region
      $region41: #{tpu_custom_call.1} parent=39 // pred_check
        %p701 = pneg %p64
      $region42: #{tpu_custom_call.1} parent=39 // pred_check_branch
        %703 = sbr.rel (%p701) target = $region44
      $region43: #{tpu_custom_call.1} parent=39 // pred_region
        %p704 = scmp.lt.s32.totalorder %s39, 1
        %s705 = scalar_select %p704, %s39, 1
        %s706 = smul.addr %s705, 8
        %s707 = scalar_lea.vmem %s0, %s706
      $region44: #{tpu_custom_call.1} parent=39 // pred_fallthru
        _
      // Predicated region
      $region45: #{tpu_custom_call.1} parent=39 // pred_check
        %p708 = pneg %p132
      $region46: #{tpu_custom_call.1} parent=39 // pred_check_branch
        %710 = sbr.rel (%p708) target = $region48
      $region47: #{tpu_custom_call.1} parent=39 // pred_region
        %p711 = scmp.lt.s32.totalorder %s39, 1
        %s712 = scalar_select %p711, %s39, 1
        %s713 = scalar_lea.vmem %s3, %s712
      $region48: #{tpu_custom_call.1} parent=39 // pred_fallthru
        _
      // Predicated region
      $region49: #{tpu_custom_call.1} parent=39 // pred_check
        %p714 = pneg %p158
      $region50: #{tpu_custom_call.1} parent=39 // pred_check_branch
        %716 = sbr.rel (%p714) target = $region52
      $region51: #{tpu_custom_call.1} parent=39 // pred_region
        %p717 = scmp.lt.s32.totalorder %s40, 1
        %s718 = scalar_select %p717, %s40, 1
        %s719 = smul.addr %s718, 16
        %s720 = smul.addr %s719, 4
        %s721 = scalar_lea.vmem %s4, %s720
      $region52: #{tpu_custom_call.1} parent=39 // pred_fallthru
        _
      // Predicated region
      $region53: #{tpu_custom_call.1} parent=39 // pred_check
        %p722 = pneg %p184
      $region54: #{tpu_custom_call.1} parent=39 // pred_check_branch
        %724 = sbr.rel (%p722) target = $region56
      $region55: #{tpu_custom_call.1} parent=39 // pred_region
        %p725 = scmp.lt.s32.totalorder %s40, 1
        %s726 = scalar_select %p725, %s40, 1
        %s727 = smul.addr %s726, 4
        %s728 = scalar_lea.vmem %s5, %s727
      $region56: #{tpu_custom_call.1} parent=39 // pred_fallthru
        _
      // Predicated region
      $region57: #{tpu_custom_call.1} parent=39 // pred_check
        %p729 = pneg %p210
      $region58: #{tpu_custom_call.1} parent=39 // pred_check_branch
        %731 = sbr.rel (%p729) target = $region60
      $region59: #{tpu_custom_call.1} parent=39 // pred_region
        %p732 = scmp.lt.s32.totalorder %s40, 1
        %s733 = scalar_select %p732, %s40, 1
        %s734 = smul.addr %s733, 16
        %s735 = smul.addr %s734, 4
        %s736 = scalar_lea.vmem %s6, %s735
      $region60: #{tpu_custom_call.1} parent=39 // pred_fallthru
        _
      // Predicated region
      $region61: #{tpu_custom_call.1} parent=39 // pred_check
        %p737 = pneg %p236
      $region62: #{tpu_custom_call.1} parent=39 // pred_check_branch
        %739 = sbr.rel (%p737) target = $region64
      $region63: #{tpu_custom_call.1} parent=39 // pred_region
        %p740 = scmp.lt.s32.totalorder %s40, 1
        %s741 = scalar_select %p740, %s40, 1
        %s742 = smul.addr %s741, 4
        %s743 = scalar_lea.vmem %s7, %s742
      $region64: #{tpu_custom_call.1} parent=39 // pred_fallthru
        _
      // Predicated region
      $region65: #{tpu_custom_call.1} parent=39 // pred_check
        %p744 = pneg %p262
      $region66: #{tpu_custom_call.1} parent=39 // pred_check_branch
        %746 = sbr.rel (%p744) target = $region68
      $region67: #{tpu_custom_call.1} parent=39 // pred_region
        %p747 = scmp.lt.s32.totalorder %s40, 1
        %s748 = scalar_select %p747, %s40, 1
        %s749 = smul.addr %s748, 16
        %s750 = smul.addr %s749, 4
        %s751 = scalar_lea.vmem %s8, %s750
      $region68: #{tpu_custom_call.1} parent=39 // pred_fallthru
        _
      // Predicated region
      $region69: #{tpu_custom_call.1} parent=39 // pred_check
        %p752 = pneg %p288
      $region70: #{tpu_custom_call.1} parent=39 // pred_check_branch
        %754 = sbr.rel (%p752) target = $region72
      $region71: #{tpu_custom_call.1} parent=39 // pred_region
        %p755 = scmp.lt.s32.totalorder %s40, 1
        %s756 = scalar_select %p755, %s40, 1
        %s757 = smul.addr %s756, 4
        %s758 = scalar_lea.vmem %s9, %s757
      $region72: #{tpu_custom_call.1} parent=39 // pred_fallthru
        _
      // Predicated region
      $region73: #{tpu_custom_call.1} parent=39 // pred_check
        %p759 = pneg %p314
      $region74: #{tpu_custom_call.1} parent=39 // pred_check_branch
        %761 = sbr.rel (%p759) target = $region76
      $region75: #{tpu_custom_call.1} parent=39 // pred_region
        %p762 = scmp.lt.s32.totalorder %s40, 1
        %s763 = scalar_select %p762, %s40, 1
        %s764 = smul.addr %s763, 4
        %s765 = smul.addr %s764, 4
        %s766 = scalar_lea.vmem %s10, %s765
      $region76: #{tpu_custom_call.1} parent=39 // pred_fallthru
        _
      // Predicated region
      $region77: #{tpu_custom_call.1} parent=39 // pred_check
        %p767 = pneg %p340
      $region78: #{tpu_custom_call.1} parent=39 // pred_check_branch
        %769 = sbr.rel (%p767) target = $region80
      $region79: #{tpu_custom_call.1} parent=39 // pred_region
        %p770 = scmp.lt.s32.totalorder %s40, 1
        %s771 = scalar_select %p770, %s40, 1
        %s772 = scalar_lea.vmem %s11, %s771
      $region80: #{tpu_custom_call.1} parent=39 // pred_fallthru
        _
      // Predicated region
      $region81: #{tpu_custom_call.1} parent=39 // pred_check
        %p773 = pneg %p366
      $region82: #{tpu_custom_call.1} parent=39 // pred_check_branch
        %775 = sbr.rel (%p773) target = $region84
      $region83: #{tpu_custom_call.1} parent=39 // pred_region
        %p776 = scmp.lt.s32.totalorder %s40, 1
        %s777 = scalar_select %p776, %s40, 1
        %s778 = scalar_lea.vmem %s12, %s777
      $region84: #{tpu_custom_call.1} parent=39 // pred_fallthru
        _
      // Predicated region
      $region85: #{tpu_custom_call.1} parent=39 // pred_check
        %p779 = pneg %p392
      $region86: #{tpu_custom_call.1} parent=39 // pred_check_branch
        %781 = sbr.rel (%p779) target = $region88
      $region87: #{tpu_custom_call.1} parent=39 // pred_region
        %p782 = scmp.lt.s32.totalorder %s40, 1
        %s783 = scalar_select %p782, %s40, 1
        %s784 = scalar_lea.vmem %s13, %s783
      $region88: #{tpu_custom_call.1} parent=39 // pred_fallthru
        _
      // Predicated region
      $region89: #{tpu_custom_call.1} parent=39 // pred_check
        %p785 = pneg %p418
      $region90: #{tpu_custom_call.1} parent=39 // pred_check_branch
        %787 = sbr.rel (%p785) target = $region92
      $region91: #{tpu_custom_call.1} parent=39 // pred_region
        %p788 = scmp.lt.s32.totalorder %s40, 1
        %s789 = scalar_select %p788, %s40, 1
        %s790 = smul.addr %s789, 4
        %s791 = smul.addr %s790, 4
        %s792 = scalar_lea.vmem %s14, %s791
      $region92: #{tpu_custom_call.1} parent=39 // pred_fallthru
        _
      // Predicated region
      $region93: #{tpu_custom_call.1} parent=39 // pred_check
        %p793 = pneg %p444
      $region94: #{tpu_custom_call.1} parent=39 // pred_check_branch
        %795 = sbr.rel (%p793) target = $region96
      $region95: #{tpu_custom_call.1} parent=39 // pred_region
        %p796 = scmp.lt.s32.totalorder %s40, 1
        %s797 = scalar_select %p796, %s40, 1
        %s798 = scalar_lea.vmem %s15, %s797
      $region96: #{tpu_custom_call.1} parent=39 // pred_fallthru
        _
      // Predicated region
      $region97: #{tpu_custom_call.1} parent=39 // pred_check
        %p799 = pneg %p470
      $region98: #{tpu_custom_call.1} parent=39 // pred_check_branch
        %801 = sbr.rel (%p799) target = $region100
      $region99: #{tpu_custom_call.1} parent=39 // pred_region
        %p802 = scmp.lt.s32.totalorder %s40, 1
        %s803 = scalar_select %p802, %s40, 1
        %s804 = smul.addr %s803, 8
        %s805 = smul.addr %s804, 4
        %s806 = scalar_lea.vmem %s16, %s805
      $region100: #{tpu_custom_call.1} parent=39 // pred_fallthru
        _
      // Predicated region
      $region101: #{tpu_custom_call.1} parent=39 // pred_check
        %p807 = pneg %p496
      $region102: #{tpu_custom_call.1} parent=39 // pred_check_branch
        %809 = sbr.rel (%p807) target = $region104
      $region103: #{tpu_custom_call.1} parent=39 // pred_region
        %p810 = scmp.lt.s32.totalorder %s40, 1
        %s811 = scalar_select %p810, %s40, 1
        %s812 = scalar_lea.vmem %s17, %s811
      $region104: #{tpu_custom_call.1} parent=39 // pred_fallthru
        _
      // Predicated region
      $region105: #{tpu_custom_call.1} parent=39 // pred_check
        %p813 = pneg %p522
      $region106: #{tpu_custom_call.1} parent=39 // pred_check_branch
        %815 = sbr.rel (%p813) target = $region108
      $region107: #{tpu_custom_call.1} parent=39 // pred_region
        %p816 = scmp.lt.s32.totalorder %s40, 1
        %s817 = scalar_select %p816, %s40, 1
        %s818 = scalar_lea.vmem %s18, %s817
      $region108: #{tpu_custom_call.1} parent=39 // pred_fallthru
        _
      // Predicated region
      $region109: #{tpu_custom_call.1} parent=39 // pred_check
        %p819 = pneg %p548
      $region110: #{tpu_custom_call.1} parent=39 // pred_check_branch
        %821 = sbr.rel (%p819) target = $region112
      $region111: #{tpu_custom_call.1} parent=39 // pred_region
        %p822 = scmp.lt.s32.totalorder %s40, 1
        %s823 = scalar_select %p822, %s40, 1
        %s824 = scalar_lea.vmem %s19, %s823
      $region112: #{tpu_custom_call.1} parent=39 // pred_fallthru
        _
    $region40: #{tpu_custom_call.1} parent=5 // pred_fallthru
      _
    %p825 = scmp.le.s32.totalorder 1, %s32
    %p826 = scmp.lt.s32.totalorder %s32, 5
    %p827 = pnand %p825, %p826
    %p828 = pneg %p827
    // Predicated region
    $region113: #{tpu_custom_call.1} parent=5 // pred_check
      _
    $region114: #{tpu_custom_call.1} parent=5 // pred_check_branch
      %830 = sbr.rel (%p827) target = $region116
    $region115: #{tpu_custom_call.1} parent=5 // pred_region
      %s831 = ssub.s32 %s32, 1
      %p832 = scmp.lt.s32.totalorder %s41, 1
      %s833 = scalar_select %p832, %s41, 1
      %s834 = smul.addr %s833, 8
      %s835 = scalar_lea.vmem %s0, %s834
      %p836 = pneg %p70
      %p837 = pneg %p67
      %p838 = pneg %p91
      %p839 = pneg %p88
      %p840 = pneg %p112
      %p841 = pneg %p109
      %p842 = scmp.lt.s32.totalorder %s41, 1
      %s843 = scalar_select %p842, %s41, 1
      %s844 = scalar_lea.vmem %s3, %s843
      %p845 = pneg %p138
      %p846 = pneg %p135
      %p847 = scmp.lt.s32.totalorder %s42, 1
      %s848 = scalar_select %p847, %s42, 1
      %s849 = smul.addr %s848, 16
      %s850 = smul.addr %s849, 4
      %s851 = scalar_lea.vmem %s4, %s850
      %p852 = pneg %p164
      %p853 = pneg %p161
      %p854 = scmp.lt.s32.totalorder %s42, 1
      %s855 = scalar_select %p854, %s42, 1
      %s856 = smul.addr %s855, 4
      %s857 = scalar_lea.vmem %s5, %s856
      %p858 = pneg %p190
      %p859 = pneg %p187
      %p860 = scmp.lt.s32.totalorder %s42, 1
      %s861 = scalar_select %p860, %s42, 1
      %s862 = smul.addr %s861, 16
      %s863 = smul.addr %s862, 4
      %s864 = scalar_lea.vmem %s6, %s863
      %p865 = pneg %p216
      %p866 = pneg %p213
      %p867 = scmp.lt.s32.totalorder %s42, 1
      %s868 = scalar_select %p867, %s42, 1
      %s869 = smul.addr %s868, 4
      %s870 = scalar_lea.vmem %s7, %s869
      %p871 = pneg %p242
      %p872 = pneg %p239
      %p873 = scmp.lt.s32.totalorder %s42, 1
      %s874 = scalar_select %p873, %s42, 1
      %s875 = smul.addr %s874, 16
      %s876 = smul.addr %s875, 4
      %s877 = scalar_lea.vmem %s8, %s876
      %p878 = pneg %p268
      %p879 = pneg %p265
      %p880 = scmp.lt.s32.totalorder %s42, 1
      %s881 = scalar_select %p880, %s42, 1
      %s882 = smul.addr %s881, 4
      %s883 = scalar_lea.vmem %s9, %s882
      %p884 = pneg %p294
      %p885 = pneg %p291
      %p886 = scmp.lt.s32.totalorder %s42, 1
      %s887 = scalar_select %p886, %s42, 1
      %s888 = smul.addr %s887, 4
      %s889 = smul.addr %s888, 4
      %s890 = scalar_lea.vmem %s10, %s889
      %p891 = pneg %p320
      %p892 = pneg %p317
      %p893 = scmp.lt.s32.totalorder %s42, 1
      %s894 = scalar_select %p893, %s42, 1
      %s895 = scalar_lea.vmem %s11, %s894
      %p896 = pneg %p346
      %p897 = pneg %p343
      %p898 = scmp.lt.s32.totalorder %s42, 1
      %s899 = scalar_select %p898, %s42, 1
      %s900 = scalar_lea.vmem %s12, %s899
      %p901 = pneg %p372
      %p902 = pneg %p369
      %p903 = scmp.lt.s32.totalorder %s42, 1
      %s904 = scalar_select %p903, %s42, 1
      %s905 = scalar_lea.vmem %s13, %s904
      %p906 = pneg %p398
      %p907 = pneg %p395
      %p908 = scmp.lt.s32.totalorder %s42, 1
      %s909 = scalar_select %p908, %s42, 1
      %s910 = smul.addr %s909, 4
      %s911 = smul.addr %s910, 4
      %s912 = scalar_lea.vmem %s14, %s911
      %p913 = pneg %p424
      %p914 = pneg %p421
      %p915 = scmp.lt.s32.totalorder %s42, 1
      %s916 = scalar_select %p915, %s42, 1
      %s917 = scalar_lea.vmem %s15, %s916
      %p918 = pneg %p450
      %p919 = pneg %p447
      %p920 = scmp.lt.s32.totalorder %s42, 1
      %s921 = scalar_select %p920, %s42, 1
      %s922 = smul.addr %s921, 8
      %s923 = smul.addr %s922, 4
      %s924 = scalar_lea.vmem %s16, %s923
      %p925 = pneg %p476
      %p926 = pneg %p473
      %p927 = scmp.lt.s32.totalorder %s42, 1
      %s928 = scalar_select %p927, %s42, 1
      %s929 = scalar_lea.vmem %s17, %s928
      %p930 = pneg %p502
      %p931 = pneg %p499
      %p932 = scmp.lt.s32.totalorder %s42, 1
      %s933 = scalar_select %p932, %s42, 1
      %s934 = scalar_lea.vmem %s18, %s933
      %p935 = pneg %p528
      %p936 = pneg %p525
      %p937 = scmp.lt.s32.totalorder %s42, 1
      %s938 = scalar_select %p937, %s42, 1
      %s939 = scalar_lea.vmem %s19, %s938
      %p940 = pneg %p554
      %p941 = pneg %p551
      %p942 = pneg %p575
      %p943 = pneg %p572
      %p944 = pneg %p596
      %p945 = pneg %p593
      %p946 = pneg %p617
      %p947 = pneg %p614
      %p948 = pneg %p638
      %p949 = pneg %p635
      %p950 = pneg %p664
      %p951 = pneg %p661
      %p952 = scmp.lt.s32.totalorder %s41, 1
      %s953 = scalar_select %p952, %s41, 1
      %s954 = scalar_lea.vmem %s24, %s953
      %p955 = scmp.lt.s32.totalorder %s41, 1
      %s956 = scalar_select %p955, %s41, 1
      %s957 = smul.addr %s956, 8
      %s958 = scalar_lea.vmem %s0, %s957
      %p959 = scmp.lt.s32.totalorder %s41, 1
      %s960 = scalar_select %p959, %s41, 1
      %s961 = scalar_lea.vmem %s3, %s960
      %p962 = scmp.lt.s32.totalorder %s42, 1
      %s963 = scalar_select %p962, %s42, 1
      %s964 = smul.addr %s963, 16
      %s965 = smul.addr %s964, 4
      %s966 = scalar_lea.vmem %s4, %s965
      %p967 = scmp.lt.s32.totalorder %s42, 1
      %s968 = scalar_select %p967, %s42, 1
      %s969 = smul.addr %s968, 4
      %s970 = scalar_lea.vmem %s5, %s969
      %p971 = scmp.lt.s32.totalorder %s42, 1
      %s972 = scalar_select %p971, %s42, 1
      %s973 = smul.addr %s972, 16
      %s974 = smul.addr %s973, 4
      %s975 = scalar_lea.vmem %s6, %s974
      %p976 = scmp.lt.s32.totalorder %s42, 1
      %s977 = scalar_select %p976, %s42, 1
      %s978 = smul.addr %s977, 4
      %s979 = scalar_lea.vmem %s7, %s978
      %p980 = scmp.lt.s32.totalorder %s42, 1
      %s981 = scalar_select %p980, %s42, 1
      %s982 = smul.addr %s981, 16
      %s983 = smul.addr %s982, 4
      %s984 = scalar_lea.vmem %s8, %s983
      %p985 = scmp.lt.s32.totalorder %s42, 1
      %s986 = scalar_select %p985, %s42, 1
      %s987 = smul.addr %s986, 4
      %s988 = scalar_lea.vmem %s9, %s987
      %p989 = scmp.lt.s32.totalorder %s42, 1
      %s990 = scalar_select %p989, %s42, 1
      %s991 = smul.addr %s990, 4
      %s992 = smul.addr %s991, 4
      %s993 = scalar_lea.vmem %s10, %s992
      %p994 = scmp.lt.s32.totalorder %s42, 1
      %s995 = scalar_select %p994, %s42, 1
      %s996 = scalar_lea.vmem %s11, %s995
      %p997 = scmp.lt.s32.totalorder %s42, 1
      %s998 = scalar_select %p997, %s42, 1
      %s999 = scalar_lea.vmem %s12, %s998
      %p1000 = scmp.lt.s32.totalorder %s42, 1
      %s1001 = scalar_select %p1000, %s42, 1
      %s1002 = scalar_lea.vmem %s13, %s1001
      %p1003 = scmp.lt.s32.totalorder %s42, 1
      %s1004 = scalar_select %p1003, %s42, 1
      %s1005 = smul.addr %s1004, 4
      %s1006 = smul.addr %s1005, 4
      %s1007 = scalar_lea.vmem %s14, %s1006
      %p1008 = scmp.lt.s32.totalorder %s42, 1
      %s1009 = scalar_select %p1008, %s42, 1
      %s1010 = scalar_lea.vmem %s15, %s1009
      %p1011 = scmp.lt.s32.totalorder %s42, 1
      %s1012 = scalar_select %p1011, %s42, 1
      %s1013 = smul.addr %s1012, 8
      %s1014 = smul.addr %s1013, 4
      %s1015 = scalar_lea.vmem %s16, %s1014
      %p1016 = scmp.lt.s32.totalorder %s42, 1
      %s1017 = scalar_select %p1016, %s42, 1
      %s1018 = scalar_lea.vmem %s17, %s1017
      %p1019 = scmp.lt.s32.totalorder %s42, 1
      %s1020 = scalar_select %p1019, %s42, 1
      %s1021 = scalar_lea.vmem %s18, %s1020
      %p1022 = scmp.lt.s32.totalorder %s42, 1
      %s1023 = scalar_select %p1022, %s42, 1
      %s1024 = scalar_lea.vmem %s19, %s1023
      %p1025 = scmp.lt.s32.totalorder %s41, 1
      %s1026 = scalar_select %p1025, %s41, 1
      %s1027 = scalar_lea.vmem %s24, %s1026
      %p1029 = scmp.eq.s32.totalorder %s42, 0
      // Predicated region
      $region117: #{tpu_custom_call.1} parent=115 // pred_check
        %p1030 = pneg %p1029
      $region118: #{tpu_custom_call.1} parent=115 // pred_check_branch
        %1032 = sbr.rel (%p1030) target = $region120
      $region119: #{tpu_custom_call.1} parent=115 // pred_region
        %v1033 = vld [vmem:[%s958] sm:$0xff]
        %v1034 = vld [vmem:[%s1] sm:$0xff]
        %v1035 = vld [vmem:[%s1 + $0x8] sm:$0x7f]
        %v1036 = vld [vmem:[%s2] sm:$0x1]
        %v1038 = vperm.slane %v1036, 0
        %vm1040 = vcmask 121856
        %v1042 = vsel %vm1040, %v1033, 0
        %vm1044 = vcmask 1046528
        %v1046 = vsel %vm1044, %v1035, 0
        %1048 = vmatpush.msra.mxu0 0.0
        %1049 = vmatpush.msra.mxu0 0.0
        %1050 = vmatpush.msra.mxu0 0.0
        %1051 = vmatpush.msra.mxu0 0.0
        %1052 = vmatpush.msra.mxu0 0.0
        %1053 = vmatpush.msra.mxu0 0.0
        %1054 = vmatpush.msra.mxu0 0.0
        %1055 = vmatpush.msra.mxu0 0.0
        %1056 = vmatpush.msra.mxu0 0.0
        %1057 = vmatpush.msra.mxu0 0.0
        %1058 = vmatpush.msra.mxu0 0.0
        %1059 = vmatpush.msra.mxu0 0.0
        %1060 = vmatpush.msra.mxu0 0.0
        %1061 = vmatpush.msra.mxu0 0.0
        %1062 = vmatpush.msra.mxu0 %v1046
        %1063 = vmatpush.msra.mxu0 %v1034
        %1064 = vmatmul.f32.gmra.mxu0 %v1042
        %v1065 = vpop.f32.mrf.mxu0
        %v1066 = vadd.f32 %v1038, %v1065
        %1067 = vdwg.mxu0
        %v1068 = vld [vmem:[%s961] sm:$0x1]
        %v1070 = vperm.slane %v1068, 0
        %v1072 = vadd.f32 %v1066, %v1070
        %vm1073 = vcmask 261120
        %1074 = vst.msk [vmem:[#allocation2] sm:$0xff] %vm1073, %v1072
      $region120: #{tpu_custom_call.1} parent=115 // pred_fallthru
        _
      %v1075 = vld [vmem:[#allocation2] sm:$0xff]
      %v1076 = vpack.c.bf16 %v1075, %v1075
      %v1077 = vld [vmem:[%s966] sm:$0xf]
      %v1078 = vld [vmem:[%s966 + $0x4] sm:$0xf]
      %v1079 = vld [vmem:[%s966 + $0x8] sm:$0xf]
      %v1080 = vld [vmem:[%s966 + $0xc] sm:$0xf]
      %v1081 = vld [vmem:[%s966 + $0x10] sm:$0xf]
      %v1082 = vld [vmem:[%s966 + $0x14] sm:$0xf]
      %v1083 = vld [vmem:[%s966 + $0x18] sm:$0xf]
      %v1084 = vld [vmem:[%s966 + $0x1c] sm:$0xf]
      %v1085 = vld [vmem:[%s966 + $0x20] sm:$0xf]
      %v1086 = vld [vmem:[%s966 + $0x24] sm:$0xf]
      %v1087 = vld [vmem:[%s966 + $0x28] sm:$0xf]
      %v1088 = vld [vmem:[%s966 + $0x2c] sm:$0xf]
      %v1089 = vld [vmem:[%s966 + $0x30] sm:$0xf]
      %v1090 = vld [vmem:[%s966 + $0x34] sm:$0xf]
      %v1091 = vld [vmem:[%s966 + $0x38] sm:$0xf]
      %v1092 = vld [vmem:[%s966 + $0x3c] sm:$0xf]
      %v1093 = vld [vmem:[%s970] sm:$0x1]
      %v1094 = vld [vmem:[%s970 + $0x1] sm:$0x1]
      %v1095 = vld [vmem:[%s970 + $0x2] sm:$0x1]
      %v1096 = vld [vmem:[%s970 + $0x3] sm:$0x1]
      %v1101 = vperm.slane %v1093, 0
      %v1102 = vperm.slane %v1094, 0
      %v1103 = vperm.slane %v1095, 0
      %v1104 = vperm.slane %v1096, 0
      %v1113 = vunpack.c.l.b16 %v1077
      %v1114 = vunpack.c.l.b16 %v1078
      %v1115 = vunpack.c.l.b16 %v1079
      %v1116 = vunpack.c.l.b16 %v1080
      %v1117 = vpack.c.b16 %v1114, %v1113
      %v1118 = vpack.c.b16 %v1116, %v1115
      %vm1121 = vcmask 261120
      %v1123 = vsel %vm1121, %v1076, 0
      %1125 = vmatpush.bf16.msra.mxu0 0
      %1126 = vmatpush.bf16.msra.mxu0 0
      %1127 = vmatpush.bf16.msra.mxu0 0
      %1128 = vmatpush.bf16.msra.mxu0 0
      %1129 = vmatpush.bf16.msra.mxu0 0
      %1130 = vmatpush.bf16.msra.mxu0 0
      %1131 = vmatpush.bf16.msra.mxu0 %v1118
      %1132 = vmatpush.bf16.msra.mxu0 %v1117
      %1133 = vmatmul.bf16.gmra.mxu0 %v1123
      %v1134 = vpop.f32.mrf.mxu0
      %v1135 = vadd.f32 %v1101, %v1134
      %v1136 = vpop.f32.mrf.mxu0
      %1137 = vdwg.mxu0
      %v1142 = vunpack.c.l.b16 %v1081
      %v1143 = vunpack.c.l.b16 %v1082
      %v1144 = vunpack.c.l.b16 %v1083
      %v1145 = vunpack.c.l.b16 %v1084
      %v1146 = vpack.c.b16 %v1143, %v1142
      %v1147 = vpack.c.b16 %v1145, %v1144
      %1150 = vmatpush.bf16.msra.mxu0 0
      %1151 = vmatpush.bf16.msra.mxu0 0
      %1152 = vmatpush.bf16.msra.mxu0 0
      %1153 = vmatpush.bf16.msra.mxu0 0
      %1154 = vmatpush.bf16.msra.mxu0 0
      %1155 = vmatpush.bf16.msra.mxu0 0
      %1156 = vmatpush.bf16.msra.mxu0 %v1147
      %1157 = vmatpush.bf16.msra.mxu0 %v1146
      %1158 = vmatmul.bf16.gmra.mxu0 %v1123
      %v1159 = vpop.f32.mrf.mxu0
      %v1160 = vadd.f32 %v1102, %v1159
      %v1161 = vpop.f32.mrf.mxu0
      %1162 = vdwg.mxu0
      %v1167 = vunpack.c.l.b16 %v1085
      %v1168 = vunpack.c.l.b16 %v1086
      %v1169 = vunpack.c.l.b16 %v1087
      %v1170 = vunpack.c.l.b16 %v1088
      %v1171 = vpack.c.b16 %v1168, %v1167
      %v1172 = vpack.c.b16 %v1170, %v1169
      %1175 = vmatpush.bf16.msra.mxu0 0
      %1176 = vmatpush.bf16.msra.mxu0 0
      %1177 = vmatpush.bf16.msra.mxu0 0
      %1178 = vmatpush.bf16.msra.mxu0 0
      %1179 = vmatpush.bf16.msra.mxu0 0
      %1180 = vmatpush.bf16.msra.mxu0 0
      %1181 = vmatpush.bf16.msra.mxu0 %v1172
      %1182 = vmatpush.bf16.msra.mxu0 %v1171
      %1183 = vmatmul.bf16.gmra.mxu0 %v1123
      %v1184 = vpop.f32.mrf.mxu0
      %v1185 = vadd.f32 %v1103, %v1184
      %v1186 = vpop.f32.mrf.mxu0
      %1187 = vdwg.mxu0
      %v1192 = vunpack.c.l.b16 %v1089
      %v1193 = vunpack.c.l.b16 %v1090
      %v1194 = vunpack.c.l.b16 %v1091
      %v1195 = vunpack.c.l.b16 %v1092
      %v1196 = vpack.c.b16 %v1193, %v1192
      %v1197 = vpack.c.b16 %v1195, %v1194
      %1200 = vmatpush.bf16.msra.mxu0 0
      %1201 = vmatpush.bf16.msra.mxu0 0
      %1202 = vmatpush.bf16.msra.mxu0 0
      %1203 = vmatpush.bf16.msra.mxu0 0
      %1204 = vmatpush.bf16.msra.mxu0 0
      %1205 = vmatpush.bf16.msra.mxu0 0
      %1206 = vmatpush.bf16.msra.mxu0 %v1197
      %1207 = vmatpush.bf16.msra.mxu0 %v1196
      %1208 = vmatmul.bf16.gmra.mxu0 %v1123
      %v1209 = vpop.f32.mrf.mxu0
      %v1210 = vadd.f32 %v1104, %v1209
      %v1211 = vpop.f32.mrf.mxu0
      %1212 = vdwg.mxu0
      %v1213 = vld [vmem:[%s975] sm:$0xf]
      %v1214 = vld [vmem:[%s975 + $0x4] sm:$0xf]
      %v1215 = vld [vmem:[%s975 + $0x8] sm:$0xf]
      %v1216 = vld [vmem:[%s975 + $0xc] sm:$0xf]
      %v1217 = vld [vmem:[%s975 + $0x10] sm:$0xf]
      %v1218 = vld [vmem:[%s975 + $0x14] sm:$0xf]
      %v1219 = vld [vmem:[%s975 + $0x18] sm:$0xf]
      %v1220 = vld [vmem:[%s975 + $0x1c] sm:$0xf]
      %v1221 = vld [vmem:[%s975 + $0x20] sm:$0xf]
      %v1222 = vld [vmem:[%s975 + $0x24] sm:$0xf]
      %v1223 = vld [vmem:[%s975 + $0x28] sm:$0xf]
      %v1224 = vld [vmem:[%s975 + $0x2c] sm:$0xf]
      %v1225 = vld [vmem:[%s975 + $0x30] sm:$0xf]
      %v1226 = vld [vmem:[%s975 + $0x34] sm:$0xf]
      %v1227 = vld [vmem:[%s975 + $0x38] sm:$0xf]
      %v1228 = vld [vmem:[%s975 + $0x3c] sm:$0xf]
      %v1229 = vld [vmem:[%s979] sm:$0x1]
      %v1230 = vld [vmem:[%s979 + $0x1] sm:$0x1]
      %v1231 = vld [vmem:[%s979 + $0x2] sm:$0x1]
      %v1232 = vld [vmem:[%s979 + $0x3] sm:$0x1]
      %v1237 = vperm.slane %v1229, 0
      %v1238 = vperm.slane %v1230, 0
      %v1239 = vperm.slane %v1231, 0
      %v1240 = vperm.slane %v1232, 0
      %v1249 = vunpack.c.l.b16 %v1213
      %v1250 = vunpack.c.l.b16 %v1214
      %v1251 = vunpack.c.l.b16 %v1215
      %v1252 = vunpack.c.l.b16 %v1216
      %v1253 = vpack.c.b16 %v1250, %v1249
      %v1254 = vpack.c.b16 %v1252, %v1251
      %1257 = vmatpush.bf16.msra.mxu0 0
      %1258 = vmatpush.bf16.msra.mxu0 0
      %1259 = vmatpush.bf16.msra.mxu0 0
      %1260 = vmatpush.bf16.msra.mxu0 0
      %1261 = vmatpush.bf16.msra.mxu0 0
      %1262 = vmatpush.bf16.msra.mxu0 0
      %1263 = vmatpush.bf16.msra.mxu0 %v1254
      %1264 = vmatpush.bf16.msra.mxu0 %v1253
      %1265 = vmatmul.bf16.gmra.mxu0 %v1123
      %v1266 = vpop.f32.mrf.mxu0
      %v1267 = vadd.f32 %v1237, %v1266
      %v1268 = vpop.f32.mrf.mxu0
      %1269 = vdwg.mxu0
      %v1274 = vunpack.c.l.b16 %v1217
      %v1275 = vunpack.c.l.b16 %v1218
      %v1276 = vunpack.c.l.b16 %v1219
      %v1277 = vunpack.c.l.b16 %v1220
      %v1278 = vpack.c.b16 %v1275, %v1274
      %v1279 = vpack.c.b16 %v1277, %v1276
      %1282 = vmatpush.bf16.msra.mxu0 0
      %1283 = vmatpush.bf16.msra.mxu0 0
      %1284 = vmatpush.bf16.msra.mxu0 0
      %1285 = vmatpush.bf16.msra.mxu0 0
      %1286 = vmatpush.bf16.msra.mxu0 0
      %1287 = vmatpush.bf16.msra.mxu0 0
      %1288 = vmatpush.bf16.msra.mxu0 %v1279
      %1289 = vmatpush.bf16.msra.mxu0 %v1278
      %1290 = vmatmul.bf16.gmra.mxu0 %v1123
      %v1291 = vpop.f32.mrf.mxu0
      %v1292 = vadd.f32 %v1238, %v1291
      %v1293 = vpop.f32.mrf.mxu0
      %1294 = vdwg.mxu0
      %v1299 = vunpack.c.l.b16 %v1221
      %v1300 = vunpack.c.l.b16 %v1222
      %v1301 = vunpack.c.l.b16 %v1223
      %v1302 = vunpack.c.l.b16 %v1224
      %v1303 = vpack.c.b16 %v1300, %v1299
      %v1304 = vpack.c.b16 %v1302, %v1301
      %1307 = vmatpush.bf16.msra.mxu0 0
      %1308 = vmatpush.bf16.msra.mxu0 0
      %1309 = vmatpush.bf16.msra.mxu0 0
      %1310 = vmatpush.bf16.msra.mxu0 0
      %1311 = vmatpush.bf16.msra.mxu0 0
      %1312 = vmatpush.bf16.msra.mxu0 0
      %1313 = vmatpush.bf16.msra.mxu0 %v1304
      %1314 = vmatpush.bf16.msra.mxu0 %v1303
      %1315 = vmatmul.bf16.gmra.mxu0 %v1123
      %v1316 = vpop.f32.mrf.mxu0
      %v1317 = vadd.f32 %v1239, %v1316
      %v1318 = vpop.f32.mrf.mxu0
      %1319 = vdwg.mxu0
      %v1324 = vunpack.c.l.b16 %v1225
      %v1325 = vunpack.c.l.b16 %v1226
      %v1326 = vunpack.c.l.b16 %v1227
      %v1327 = vunpack.c.l.b16 %v1228
      %v1328 = vpack.c.b16 %v1325, %v1324
      %v1329 = vpack.c.b16 %v1327, %v1326
      %1332 = vmatpush.bf16.msra.mxu0 0
      %1333 = vmatpush.bf16.msra.mxu0 0
      %1334 = vmatpush.bf16.msra.mxu0 0
      %1335 = vmatpush.bf16.msra.mxu0 0
      %1336 = vmatpush.bf16.msra.mxu0 0
      %1337 = vmatpush.bf16.msra.mxu0 0
      %1338 = vmatpush.bf16.msra.mxu0 %v1329
      %1339 = vmatpush.bf16.msra.mxu0 %v1328
      %1340 = vmatmul.bf16.gmra.mxu0 %v1123
      %v1341 = vpop.f32.mrf.mxu0
      %v1342 = vadd.f32 %v1240, %v1341
      %v1343 = vpop.f32.mrf.mxu0
      %1344 = vdwg.mxu0
      %v1345 = vld [vmem:[%s984] sm:$0xf]
      %v1346 = vld [vmem:[%s984 + $0x4] sm:$0xf]
      %v1347 = vld [vmem:[%s984 + $0x8] sm:$0xf]
      %v1348 = vld [vmem:[%s984 + $0xc] sm:$0xf]
      %v1349 = vld [vmem:[%s984 + $0x10] sm:$0xf]
      %v1350 = vld [vmem:[%s984 + $0x14] sm:$0xf]
      %v1351 = vld [vmem:[%s984 + $0x18] sm:$0xf]
      %v1352 = vld [vmem:[%s984 + $0x1c] sm:$0xf]
      %v1353 = vld [vmem:[%s984 + $0x20] sm:$0xf]
      %v1354 = vld [vmem:[%s984 + $0x24] sm:$0xf]
      %v1355 = vld [vmem:[%s984 + $0x28] sm:$0xf]
      %v1356 = vld [vmem:[%s984 + $0x2c] sm:$0xf]
      %v1357 = vld [vmem:[%s984 + $0x30] sm:$0xf]
      %v1358 = vld [vmem:[%s984 + $0x34] sm:$0xf]
      %v1359 = vld [vmem:[%s984 + $0x38] sm:$0xf]
      %v1360 = vld [vmem:[%s984 + $0x3c] sm:$0xf]
      %v1361 = vld [vmem:[%s988] sm:$0x1]
      %v1362 = vld [vmem:[%s988 + $0x1] sm:$0x1]
      %v1363 = vld [vmem:[%s988 + $0x2] sm:$0x1]
      %v1364 = vld [vmem:[%s988 + $0x3] sm:$0x1]
      %v1369 = vperm.slane %v1361, 0
      %v1370 = vperm.slane %v1362, 0
      %v1371 = vperm.slane %v1363, 0
      %v1372 = vperm.slane %v1364, 0
      %v1381 = vunpack.c.l.b16 %v1345
      %v1382 = vunpack.c.l.b16 %v1346
      %v1383 = vunpack.c.l.b16 %v1347
      %v1384 = vunpack.c.l.b16 %v1348
      %v1385 = vpack.c.b16 %v1382, %v1381
      %v1386 = vpack.c.b16 %v1384, %v1383
      %1389 = vmatpush.bf16.msra.mxu0 0
      %1390 = vmatpush.bf16.msra.mxu0 0
      %1391 = vmatpush.bf16.msra.mxu0 0
      %1392 = vmatpush.bf16.msra.mxu0 0
      %1393 = vmatpush.bf16.msra.mxu0 0
      %1394 = vmatpush.bf16.msra.mxu0 0
      %1395 = vmatpush.bf16.msra.mxu0 %v1386
      %1396 = vmatpush.bf16.msra.mxu0 %v1385
      %1397 = vmatmul.bf16.gmra.mxu0 %v1123
      %v1398 = vpop.f32.mrf.mxu0
      %v1399 = vadd.f32 %v1369, %v1398
      %v1400 = vpop.f32.mrf.mxu0
      %1401 = vdwg.mxu0
      %v1406 = vunpack.c.l.b16 %v1349
      %v1407 = vunpack.c.l.b16 %v1350
      %v1408 = vunpack.c.l.b16 %v1351
      %v1409 = vunpack.c.l.b16 %v1352
      %v1410 = vpack.c.b16 %v1407, %v1406
      %v1411 = vpack.c.b16 %v1409, %v1408
      %1414 = vmatpush.bf16.msra.mxu0 0
      %1415 = vmatpush.bf16.msra.mxu0 0
      %1416 = vmatpush.bf16.msra.mxu0 0
      %1417 = vmatpush.bf16.msra.mxu0 0
      %1418 = vmatpush.bf16.msra.mxu0 0
      %1419 = vmatpush.bf16.msra.mxu0 0
      %1420 = vmatpush.bf16.msra.mxu0 %v1411
      %1421 = vmatpush.bf16.msra.mxu0 %v1410
      %1422 = vmatmul.bf16.gmra.mxu0 %v1123
      %v1423 = vpop.f32.mrf.mxu0
      %v1424 = vadd.f32 %v1370, %v1423
      %v1425 = vpop.f32.mrf.mxu0
      %1426 = vdwg.mxu0
      %v1431 = vunpack.c.l.b16 %v1353
      %v1432 = vunpack.c.l.b16 %v1354
      %v1433 = vunpack.c.l.b16 %v1355
      %v1434 = vunpack.c.l.b16 %v1356
      %v1435 = vpack.c.b16 %v1432, %v1431
      %v1436 = vpack.c.b16 %v1434, %v1433
      %1439 = vmatpush.bf16.msra.mxu0 0
      %1440 = vmatpush.bf16.msra.mxu0 0
      %1441 = vmatpush.bf16.msra.mxu0 0
      %1442 = vmatpush.bf16.msra.mxu0 0
      %1443 = vmatpush.bf16.msra.mxu0 0
      %1444 = vmatpush.bf16.msra.mxu0 0
      %1445 = vmatpush.bf16.msra.mxu0 %v1436
      %1446 = vmatpush.bf16.msra.mxu0 %v1435
      %1447 = vmatmul.bf16.gmra.mxu0 %v1123
      %v1448 = vpop.f32.mrf.mxu0
      %v1449 = vadd.f32 %v1371, %v1448
      %v1450 = vpop.f32.mrf.mxu0
      %1451 = vdwg.mxu0
      %v1456 = vunpack.c.l.b16 %v1357
      %v1457 = vunpack.c.l.b16 %v1358
      %v1458 = vunpack.c.l.b16 %v1359
      %v1459 = vunpack.c.l.b16 %v1360
      %v1460 = vpack.c.b16 %v1457, %v1456
      %v1461 = vpack.c.b16 %v1459, %v1458
      %1464 = vmatpush.bf16.msra.mxu0 0
      %1465 = vmatpush.bf16.msra.mxu0 0
      %1466 = vmatpush.bf16.msra.mxu0 0
      %1467 = vmatpush.bf16.msra.mxu0 0
      %1468 = vmatpush.bf16.msra.mxu0 0
      %1469 = vmatpush.bf16.msra.mxu0 0
      %1470 = vmatpush.bf16.msra.mxu0 %v1461
      %1471 = vmatpush.bf16.msra.mxu0 %v1460
      %1472 = vmatmul.bf16.gmra.mxu0 %v1123
      %v1473 = vpop.f32.mrf.mxu0
      %v1474 = vadd.f32 %v1372, %v1473
      %v1475 = vpop.f32.mrf.mxu0
      %1476 = vdwg.mxu0
      %v1477 = vpack.c.bf16 %v1135, %v1135
      %v1478 = vpack.c.bf16 %v1160, %v1160
      %v1479 = vpack.c.bf16 %v1185, %v1185
      %v1480 = vpack.c.bf16 %v1210, %v1210
      %v1481 = vpack.c.bf16 %v1267, %v1267
      %v1482 = vpack.c.bf16 %v1292, %v1292
      %v1483 = vpack.c.bf16 %v1317, %v1317
      %v1484 = vpack.c.bf16 %v1342, %v1342
      %vm1485 = vcmask 64512
      %v1487 = vsel %vm1485, %v1477, 0
      %v1490 = vsel %vm1485, %v1481, 0
      %1492 = vmatpush.bf16.xpose.msra.mxu0 0
      %1493 = vmatpush.bf16.xpose.msra.mxu0 0
      %1494 = vmatpush.bf16.xpose.msra.mxu0 0
      %1495 = vmatpush.bf16.xpose.msra.mxu0 0
      %1496 = vmatpush.bf16.xpose.msra.mxu0 0
      %1497 = vmatpush.bf16.xpose.msra.mxu0 0
      %1498 = vmatpush.bf16.xpose.msra.mxu0 0
      %1499 = vmatpush.bf16.xpose.msra.mxu0 %v1490
      %1500 = vmatmul.bf16.gmra.mxu0 %v1487
      %v1501 = vpop.f32.mrf.mxu0
      %v1502 = vadd.f32 0.0, %v1501
      %v1503 = vpop.f32.mrf.mxu0
      %1504 = vdwg.mxu0
      %v1506 = vsel %vm1485, %v1478, 0
      %v1509 = vsel %vm1485, %v1482, 0
      %1511 = vmatpush.bf16.xpose.msra.mxu0 0
      %1512 = vmatpush.bf16.xpose.msra.mxu0 0
      %1513 = vmatpush.bf16.xpose.msra.mxu0 0
      %1514 = vmatpush.bf16.xpose.msra.mxu0 0
      %1515 = vmatpush.bf16.xpose.msra.mxu0 0
      %1516 = vmatpush.bf16.xpose.msra.mxu0 0
      %1517 = vmatpush.bf16.xpose.msra.mxu0 0
      %1518 = vmatpush.bf16.xpose.msra.mxu0 %v1509
      %1519 = vmatmul.bf16.gmra.mxu0 %v1506
      %v1520 = vpop.f32.mrf.mxu0
      %v1521 = vadd.f32 0.0, %v1520
      %v1522 = vpop.f32.mrf.mxu0
      %1523 = vdwg.mxu0
      %v1525 = vsel %vm1485, %v1479, 0
      %v1528 = vsel %vm1485, %v1483, 0
      %1530 = vmatpush.bf16.xpose.msra.mxu0 0
      %1531 = vmatpush.bf16.xpose.msra.mxu0 0
      %1532 = vmatpush.bf16.xpose.msra.mxu0 0
      %1533 = vmatpush.bf16.xpose.msra.mxu0 0
      %1534 = vmatpush.bf16.xpose.msra.mxu0 0
      %1535 = vmatpush.bf16.xpose.msra.mxu0 0
      %1536 = vmatpush.bf16.xpose.msra.mxu0 0
      %1537 = vmatpush.bf16.xpose.msra.mxu0 %v1528
      %1538 = vmatmul.bf16.gmra.mxu0 %v1525
      %v1539 = vpop.f32.mrf.mxu0
      %v1540 = vadd.f32 0.0, %v1539
      %v1541 = vpop.f32.mrf.mxu0
      %1542 = vdwg.mxu0
      %v1544 = vsel %vm1485, %v1480, 0
      %v1547 = vsel %vm1485, %v1484, 0
      %1549 = vmatpush.bf16.xpose.msra.mxu0 0
      %1550 = vmatpush.bf16.xpose.msra.mxu0 0
      %1551 = vmatpush.bf16.xpose.msra.mxu0 0
      %1552 = vmatpush.bf16.xpose.msra.mxu0 0
      %1553 = vmatpush.bf16.xpose.msra.mxu0 0
      %1554 = vmatpush.bf16.xpose.msra.mxu0 0
      %1555 = vmatpush.bf16.xpose.msra.mxu0 0
      %1556 = vmatpush.bf16.xpose.msra.mxu0 %v1547
      %1557 = vmatmul.bf16.gmra.mxu0 %v1544
      %v1558 = vpop.f32.mrf.mxu0
      %v1559 = vadd.f32 0.0, %v1558
      %v1560 = vpop.f32.mrf.mxu0
      %1561 = vdwg.mxu0
      %v1562 = vsel %vm1485, %v1502, -inf
      %1563 = vmax.xlane.f32.xlu0 %v1562
      %v1564 = vpop.xlane.xlu0 %1563
      %v1565 = vsel %vm1485, %v1521, -inf
      %1566 = vmax.xlane.f32.xlu0 %v1565
      %v1567 = vpop.xlane.xlu0 %1566
      %v1568 = vsel %vm1485, %v1540, -inf
      %1569 = vmax.xlane.f32.xlu0 %v1568
      %v1570 = vpop.xlane.xlu0 %1569
      %v1571 = vsel %vm1485, %v1559, -inf
      %1572 = vmax.xlane.f32.xlu0 %v1571
      %v1573 = vpop.xlane.xlu0 %1572
      %v1574 = vsub.f32 %v1502, %v1564
      %v1575 = vsub.f32 %v1521, %v1567
      %v1576 = vsub.f32 %v1540, %v1570
      %v1577 = vsub.f32 %v1559, %v1573
      %v1578 = vmul.f32 %v1574, 1.442695
      %v1579 = vpow.pop %v1578
      %v1580 = vmul.f32 %v1575, 1.442695
      %v1581 = vpow.pop %v1580
      %v1582 = vmul.f32 %v1576, 1.442695
      %v1583 = vpow.pop %v1582
      %v1584 = vmul.f32 %v1577, 1.442695
      %v1585 = vpow.pop %v1584
      %v1586 = vsel %vm1485, %v1579, 0.0
      %1587 = vadd.xlane.f32.xlu0 %v1586
      %v1588 = vpop.xlane.xlu0 %1587
      %v1589 = vsel %vm1485, %v1581, 0.0
      %1590 = vadd.xlane.f32.xlu0 %v1589
      %v1591 = vpop.xlane.xlu0 %1590
      %v1592 = vsel %vm1485, %v1583, 0.0
      %1593 = vadd.xlane.f32.xlu0 %v1592
      %v1594 = vpop.xlane.xlu0 %1593
      %v1595 = vsel %vm1485, %v1585, 0.0
      %1596 = vadd.xlane.f32.xlu0 %v1595
      %v1597 = vpop.xlane.xlu0 %1596
      %v1598 = vrcp.pop %v1588
      %v1599 = vmul.f32 %v1588, %v1598
      %v1600 = vsub.f32 1.0, %v1599
      %v1601 = vmul.f32 %v1598, %v1600
      %v1602 = vadd.f32 %v1598, %v1601
      %vm1603 = vweird.f32 %v1588
      %vm1604 = vweird.f32 %v1598
      %vm1605 = vmor %vm1603, %vm1604
      %v1606 = vsel %vm1605, %v1598, %v1602
      %v1607 = vand.u32 2147483647, %v1588
      %vm1608 = vcmp.eq.f32.partialorder %v1607, 8.507059e+37
      %v1609 = vand.u32 %v1588, 2147483648
      %v1610 = vor.u32 1.1754944e-38, %v1609
      %v1611 = vsel %vm1608, %v1610, %v1606
      %v1612 = vmul.f32 %v1579, %v1611
      %v1613 = vrcp.pop %v1591
      %v1614 = vmul.f32 %v1591, %v1613
      %v1615 = vsub.f32 1.0, %v1614
      %v1616 = vmul.f32 %v1613, %v1615
      %v1617 = vadd.f32 %v1613, %v1616
      %vm1618 = vweird.f32 %v1591
      %vm1619 = vweird.f32 %v1613
      %vm1620 = vmor %vm1618, %vm1619
      %v1621 = vsel %vm1620, %v1613, %v1617
      %v1622 = vand.u32 2147483647, %v1591
      %vm1623 = vcmp.eq.f32.partialorder %v1622, 8.507059e+37
      %v1624 = vand.u32 %v1591, 2147483648
      %v1625 = vor.u32 1.1754944e-38, %v1624
      %v1626 = vsel %vm1623, %v1625, %v1621
      %v1627 = vmul.f32 %v1581, %v1626
      %v1628 = vrcp.pop %v1594
      %v1629 = vmul.f32 %v1594, %v1628
      %v1630 = vsub.f32 1.0, %v1629
      %v1631 = vmul.f32 %v1628, %v1630
      %v1632 = vadd.f32 %v1628, %v1631
      %vm1633 = vweird.f32 %v1594
      %vm1634 = vweird.f32 %v1628
      %vm1635 = vmor %vm1633, %vm1634
      %v1636 = vsel %vm1635, %v1628, %v1632
      %v1637 = vand.u32 2147483647, %v1594
      %vm1638 = vcmp.eq.f32.partialorder %v1637, 8.507059e+37
      %v1639 = vand.u32 %v1594, 2147483648
      %v1640 = vor.u32 1.1754944e-38, %v1639
      %v1641 = vsel %vm1638, %v1640, %v1636
      %v1642 = vmul.f32 %v1583, %v1641
      %v1643 = vrcp.pop %v1597
      %v1644 = vmul.f32 %v1597, %v1643
      %v1645 = vsub.f32 1.0, %v1644
      %v1646 = vmul.f32 %v1643, %v1645
      %v1647 = vadd.f32 %v1643, %v1646
      %vm1648 = vweird.f32 %v1597
      %vm1649 = vweird.f32 %v1643
      %vm1650 = vmor %vm1648, %vm1649
      %v1651 = vsel %vm1650, %v1643, %v1647
      %v1652 = vand.u32 2147483647, %v1597
      %vm1653 = vcmp.eq.f32.partialorder %v1652, 8.507059e+37
      %v1654 = vand.u32 %v1597, 2147483648
      %v1655 = vor.u32 1.1754944e-38, %v1654
      %v1656 = vsel %vm1653, %v1655, %v1651
      %v1657 = vmul.f32 %v1585, %v1656
      %v1658 = vpack.c.bf16 %v1612, %v1612
      %v1659 = vpack.c.bf16 %v1627, %v1627
      %v1660 = vpack.c.bf16 %v1642, %v1642
      %v1661 = vpack.c.bf16 %v1657, %v1657
      %v1662 = vpack.c.bf16 %v1399, %v1399
      %v1663 = vpack.c.bf16 %v1424, %v1424
      %v1664 = vpack.c.bf16 %v1449, %v1449
      %v1665 = vpack.c.bf16 %v1474, %v1474
      %v1667 = vsel %vm1485, %v1658, 0
      %vm1669 = vcmask 1043456
      %v1671 = vsel %vm1669, %v1662, 0
      %1673 = vmatpush.bf16.msra.mxu0 0
      %1674 = vmatpush.bf16.msra.mxu0 0
      %1675 = vmatpush.bf16.msra.mxu0 0
      %1676 = vmatpush.bf16.msra.mxu0 0
      %1677 = vmatpush.bf16.msra.mxu0 0
      %1678 = vmatpush.bf16.msra.mxu0 0
      %1679 = vmatpush.bf16.msra.mxu0 0
      %1680 = vmatpush.bf16.msra.mxu0 %v1671
      %1681 = vmatmul.bf16.gmra.mxu0 %v1667
      %v1682 = vpop.f32.mrf.mxu0
      %v1683 = vadd.f32 0.0, %v1682
      %v1684 = vpop.f32.mrf.mxu0
      %1685 = vdwg.mxu0
      %v1687 = vsel %vm1485, %v1659, 0
      %v1690 = vsel %vm1669, %v1663, 0
      %1692 = vmatpush.bf16.msra.mxu0 0
      %1693 = vmatpush.bf16.msra.mxu0 0
      %1694 = vmatpush.bf16.msra.mxu0 0
      %1695 = vmatpush.bf16.msra.mxu0 0
      %1696 = vmatpush.bf16.msra.mxu0 0
      %1697 = vmatpush.bf16.msra.mxu0 0
      %1698 = vmatpush.bf16.msra.mxu0 0
      %1699 = vmatpush.bf16.msra.mxu0 %v1690
      %1700 = vmatmul.bf16.gmra.mxu0 %v1687
      %v1701 = vpop.f32.mrf.mxu0
      %v1702 = vadd.f32 0.0, %v1701
      %v1703 = vpop.f32.mrf.mxu0
      %1704 = vdwg.mxu0
      %v1706 = vsel %vm1485, %v1660, 0
      %v1709 = vsel %vm1669, %v1664, 0
      %1711 = vmatpush.bf16.msra.mxu0 0
      %1712 = vmatpush.bf16.msra.mxu0 0
      %1713 = vmatpush.bf16.msra.mxu0 0
      %1714 = vmatpush.bf16.msra.mxu0 0
      %1715 = vmatpush.bf16.msra.mxu0 0
      %1716 = vmatpush.bf16.msra.mxu0 0
      %1717 = vmatpush.bf16.msra.mxu0 0
      %1718 = vmatpush.bf16.msra.mxu0 %v1709
      %1719 = vmatmul.bf16.gmra.mxu0 %v1706
      %v1720 = vpop.f32.mrf.mxu0
      %v1721 = vadd.f32 0.0, %v1720
      %v1722 = vpop.f32.mrf.mxu0
      %1723 = vdwg.mxu0
      %v1725 = vsel %vm1485, %v1661, 0
      %v1728 = vsel %vm1669, %v1665, 0
      %1730 = vmatpush.bf16.msra.mxu0 0
      %1731 = vmatpush.bf16.msra.mxu0 0
      %1732 = vmatpush.bf16.msra.mxu0 0
      %1733 = vmatpush.bf16.msra.mxu0 0
      %1734 = vmatpush.bf16.msra.mxu0 0
      %1735 = vmatpush.bf16.msra.mxu0 0
      %1736 = vmatpush.bf16.msra.mxu0 0
      %1737 = vmatpush.bf16.msra.mxu0 %v1728
      %1738 = vmatmul.bf16.gmra.mxu0 %v1725
      %v1739 = vpop.f32.mrf.mxu0
      %v1740 = vadd.f32 0.0, %v1739
      %v1741 = vpop.f32.mrf.mxu0
      %1742 = vdwg.mxu0
      %v1743 = vpack.c.bf16 %v1683, %v1683
      %v1744 = vpack.c.bf16 %v1702, %v1702
      %v1745 = vpack.c.bf16 %v1721, %v1721
      %v1746 = vpack.c.bf16 %v1740, %v1740
      %v1747 = vld [vmem:[%s993] sm:$0xf]
      %v1748 = vld [vmem:[%s993 + $0x4] sm:$0xf]
      %v1749 = vld [vmem:[%s993 + $0x8] sm:$0xf]
      %v1750 = vld [vmem:[%s993 + $0xc] sm:$0xf]
      %v1752 = vsel %vm1485, %v1743, 0
      %v1755 = vsel %vm1669, %v1747, 0
      %1757 = vmatpush.bf16.msra.mxu0 0
      %1758 = vmatpush.bf16.msra.mxu0 0
      %1759 = vmatpush.bf16.msra.mxu0 0
      %1760 = vmatpush.bf16.msra.mxu0 0
      %1761 = vmatpush.bf16.msra.mxu0 0
      %1762 = vmatpush.bf16.msra.mxu0 0
      %1763 = vmatpush.bf16.msra.mxu0 0
      %1764 = vmatpush.bf16.msra.mxu0 %v1755
      %1765 = vmatmul.bf16.gmra.mxu0 %v1752
      %v1766 = vpop.f32.mrf.mxu0
      %v1767 = vadd.f32 0.0, %v1766
      %v1768 = vpop.f32.mrf.mxu0
      %1769 = vdwg.mxu0
      %v1771 = vsel %vm1485, %v1744, 0
      %v1774 = vsel %vm1669, %v1748, 0
      %1776 = vmatpush.bf16.msra.mxu0 0
      %1777 = vmatpush.bf16.msra.mxu0 0
      %1778 = vmatpush.bf16.msra.mxu0 0
      %1779 = vmatpush.bf16.msra.mxu0 0
      %1780 = vmatpush.bf16.msra.mxu0 0
      %1781 = vmatpush.bf16.msra.mxu0 0
      %1782 = vmatpush.bf16.msra.mxu0 0
      %1783 = vmatpush.bf16.msra.mxu0 %v1774
      %1784 = vmatmul.bf16.gmra.mxu0 %v1771
      %v1785 = vpop.f32.mrf.mxu0
      %v1786 = vadd.f32 0.0, %v1785
      %v1787 = vpop.f32.mrf.mxu0
      %1788 = vdwg.mxu0
      %v1790 = vsel %vm1485, %v1745, 0
      %v1793 = vsel %vm1669, %v1749, 0
      %1795 = vmatpush.bf16.msra.mxu0 0
      %1796 = vmatpush.bf16.msra.mxu0 0
      %1797 = vmatpush.bf16.msra.mxu0 0
      %1798 = vmatpush.bf16.msra.mxu0 0
      %1799 = vmatpush.bf16.msra.mxu0 0
      %1800 = vmatpush.bf16.msra.mxu0 0
      %1801 = vmatpush.bf16.msra.mxu0 0
      %1802 = vmatpush.bf16.msra.mxu0 %v1793
      %1803 = vmatmul.bf16.gmra.mxu0 %v1790
      %v1804 = vpop.f32.mrf.mxu0
      %v1805 = vadd.f32 0.0, %v1804
      %v1806 = vpop.f32.mrf.mxu0
      %1807 = vdwg.mxu0
      %v1809 = vsel %vm1485, %v1746, 0
      %v1812 = vsel %vm1669, %v1750, 0
      %1814 = vmatpush.bf16.msra.mxu0 0
      %1815 = vmatpush.bf16.msra.mxu0 0
      %1816 = vmatpush.bf16.msra.mxu0 0
      %1817 = vmatpush.bf16.msra.mxu0 0
      %1818 = vmatpush.bf16.msra.mxu0 0
      %1819 = vmatpush.bf16.msra.mxu0 0
      %1820 = vmatpush.bf16.msra.mxu0 0
      %1821 = vmatpush.bf16.msra.mxu0 %v1812
      %1822 = vmatmul.bf16.gmra.mxu0 %v1809
      %v1823 = vpop.f32.mrf.mxu0
      %v1824 = vadd.f32 0.0, %v1823
      %v1825 = vpop.f32.mrf.mxu0
      %1826 = vdwg.mxu0
      %v1827 = vsel %vm1121, %v1767, 0.0
      %v1828 = vsel %vm1121, %v1786, 0.0
      %v1829 = vadd.f32 %v1827, %v1828
      %v1830 = vsel %vm1121, %v1805, 0.0
      %v1831 = vadd.f32 %v1829, %v1830
      %v1832 = vsel %vm1121, %v1824, 0.0
      %v1833 = vadd.f32 %v1831, %v1832
      %v1834 = vld [vmem:[%s996] sm:$0x1]
      %v1836 = vperm.slane %v1834, 0
      %v1838 = vadd.f32 %v1833, %v1836
      %v1839 = vadd.f32 %v1075, %v1838
      %v1840 = vsel %vm1121, %v1839, 0.0
      %1841 = vadd.xlane.f32.xlu0 %v1840
      %v1842 = vpop.xlane.xlu0 %1841
      %v1843 = vrcp.pop 32.0
      %v1844 = vmul.f32 32.0, %v1843
      %v1845 = vsub.f32 1.0, %v1844
      %v1846 = vmul.f32 %v1843, %v1845
      %v1847 = vadd.f32 %v1843, %v1846
      %vm1848 = vweird.f32 %v1843
      %v1849 = vsel %vm1848, %v1843, %v1847
      %v1850 = vmul.f32 %v1842, %v1849
      %v1851 = vsub.f32 %v1839, %v1850
      %v1852 = vmul.f32 %v1851, %v1851
      %v1853 = vsel %vm1121, %v1852, 0.0
      %1854 = vadd.xlane.f32.xlu0 %v1853
      %v1855 = vpop.xlane.xlu0 %1854
      %v1856 = vmul.f32 %v1855, %v1849
      %v1857 = vadd.f32 %v1856, 1e-05
      %v1858 = vrsqrt.pop %v1857
      %v1859 = vmul.f32 %v1858, %v1857
      %v1860 = vmul.f32 %v1859, %v1858
      %v1861 = vmul.f32 0.5, %v1860
      %v1862 = vsub.f32 1.5, %v1861
      %v1863 = vmul.f32 %v1858, %v1862
      %vm1864 = vweird.f32 %v1857
      %vm1865 = vweird.f32 %v1858
      %vm1866 = vmor %vm1864, %vm1865
      %v1867 = vsel %vm1866, %v1858, %v1863
      %v1868 = vmul.f32 %v1851, %v1867
      %v1869 = vld [vmem:[%s999] sm:$0x1]
      %v1871 = vperm.slane %v1869, 0
      %v1873 = vmul.f32 %v1868, %v1871
      %v1874 = vld [vmem:[%s1002] sm:$0x1]
      %v1876 = vperm.slane %v1874, 0
      %v1878 = vadd.f32 %v1873, %v1876
      %v1879 = vpack.c.bf16 %v1878, %v1878
      %v1880 = vld [vmem:[%s1007] sm:$0xf]
      %v1881 = vld [vmem:[%s1007 + $0x4] sm:$0xf]
      %v1882 = vld [vmem:[%s1007 + $0x8] sm:$0xf]
      %v1883 = vld [vmem:[%s1007 + $0xc] sm:$0xf]
      %v1884 = vld [vmem:[%s1010] sm:$0x1]
      %v1886 = vperm.slane %v1884, 0
      %v1892 = vunpack.c.l.b16 %v1880
      %v1893 = vunpack.c.l.b16 %v1881
      %v1894 = vunpack.c.l.b16 %v1882
      %v1895 = vunpack.c.l.b16 %v1883
      %v1896 = vpack.c.b16 %v1893, %v1892
      %v1897 = vpack.c.b16 %v1895, %v1894
      %v1901 = vsel %vm1121, %v1879, 0
      %1903 = vmatpush.bf16.msra.mxu0 0
      %1904 = vmatpush.bf16.msra.mxu0 0
      %1905 = vmatpush.bf16.msra.mxu0 0
      %1906 = vmatpush.bf16.msra.mxu0 0
      %1907 = vmatpush.bf16.msra.mxu0 0
      %1908 = vmatpush.bf16.msra.mxu0 0
      %1909 = vmatpush.bf16.msra.mxu0 %v1897
      %1910 = vmatpush.bf16.msra.mxu0 %v1896
      %1911 = vmatmul.bf16.gmra.mxu0 %v1901
      %v1912 = vpop.f32.mrf.mxu0
      %v1913 = vadd.f32 %v1886, %v1912
      %v1914 = vpop.f32.mrf.mxu0
      %1915 = vdwg.mxu0
      %v1916 = vmax.f32 %v1913, 0.0
      %v1917 = vpack.c.bf16 %v1916, %v1916
      %v1918 = vld [vmem:[%s1015] sm:$0xf]
      %v1919 = vld [vmem:[%s1015 + $0x4] sm:$0xf]
      %v1920 = vld [vmem:[%s1015 + $0x8] sm:$0xf]
      %v1921 = vld [vmem:[%s1015 + $0xc] sm:$0xf]
      %v1922 = vld [vmem:[%s1015 + $0x10] sm:$0xf]
      %v1923 = vld [vmem:[%s1015 + $0x14] sm:$0xf]
      %v1924 = vld [vmem:[%s1015 + $0x18] sm:$0xf]
      %v1925 = vld [vmem:[%s1015 + $0x1c] sm:$0xf]
      %v1926 = vld [vmem:[%s1018] sm:$0x1]
      %v1928 = vperm.slane %v1926, 0
      %v1938 = vunpack.c.l.b16 %v1918
      %v1939 = vunpack.c.l.b16 %v1919
      %v1940 = vunpack.c.l.b16 %v1920
      %v1941 = vunpack.c.l.b16 %v1921
      %v1942 = vunpack.c.l.b16 %v1922
      %v1943 = vunpack.c.l.b16 %v1923
      %v1944 = vunpack.c.l.b16 %v1924
      %v1945 = vunpack.c.l.b16 %v1925
      %v1946 = vpack.c.b16 %v1939, %v1938
      %v1947 = vpack.c.b16 %v1941, %v1940
      %v1948 = vpack.c.b16 %v1943, %v1942
      %v1949 = vpack.c.b16 %v1945, %v1944
      %vm1954 = vcmask 523264
      %v1956 = vsel %vm1954, %v1917, 0
      %1958 = vmatpush.bf16.msra.mxu0 0
      %1959 = vmatpush.bf16.msra.mxu0 0
      %1960 = vmatpush.bf16.msra.mxu0 0
      %1961 = vmatpush.bf16.msra.mxu0 0
      %1962 = vmatpush.bf16.msra.mxu0 %v1949
      %1963 = vmatpush.bf16.msra.mxu0 %v1948
      %1964 = vmatpush.bf16.msra.mxu0 %v1947
      %1965 = vmatpush.bf16.msra.mxu0 %v1946
      %1966 = vmatmul.bf16.gmra.mxu0 %v1956
      %v1967 = vpop.f32.mrf.mxu0
      %v1968 = vadd.f32 %v1928, %v1967
      %v1969 = vpop.f32.mrf.mxu0
      %1970 = vdwg.mxu0
      %v1971 = vadd.f32 %v1878, %v1968
      %v1972 = vsel %vm1121, %v1971, 0.0
      %1973 = vadd.xlane.f32.xlu0 %v1972
      %v1974 = vpop.xlane.xlu0 %1973
      %v1975 = vmul.f32 %v1974, %v1849
      %v1976 = vsub.f32 %v1971, %v1975
      %v1977 = vmul.f32 %v1976, %v1976
      %v1978 = vsel %vm1121, %v1977, 0.0
      %1979 = vadd.xlane.f32.xlu0 %v1978
      %v1980 = vpop.xlane.xlu0 %1979
      %v1981 = vmul.f32 %v1980, %v1849
      %v1982 = vadd.f32 %v1981, 1e-05
      %v1983 = vrsqrt.pop %v1982
      %v1984 = vmul.f32 %v1983, %v1982
      %v1985 = vmul.f32 %v1984, %v1983
      %v1986 = vmul.f32 0.5, %v1985
      %v1987 = vsub.f32 1.5, %v1986
      %v1988 = vmul.f32 %v1983, %v1987
      %vm1989 = vweird.f32 %v1982
      %vm1990 = vweird.f32 %v1983
      %vm1991 = vmor %vm1989, %vm1990
      %v1992 = vsel %vm1991, %v1983, %v1988
      %v1993 = vmul.f32 %v1976, %v1992
      %v1994 = vld [vmem:[%s1021] sm:$0x1]
      %v1996 = vperm.slane %v1994, 0
      %v1998 = vmul.f32 %v1993, %v1996
      %v1999 = vld [vmem:[%s1024] sm:$0x1]
      %v2001 = vperm.slane %v1999, 0
      %v2003 = vadd.f32 %v1998, %v2001
      %2004 = vst.msk [vmem:[#allocation2] sm:$0xff] %vm1121, %v2003
      %p2005 = scmp.eq.s32.totalorder %s42, 1
      // Predicated region
      $region121: #{tpu_custom_call.1} parent=115 // pred_check
        %p2006 = pneg %p2005
      $region122: #{tpu_custom_call.1} parent=115 // pred_check_branch
        %2008 = sbr.rel (%p2006) target = $region124
      $region123: #{tpu_custom_call.1} parent=115 // pred_region
        %v2009 = vld [vmem:[%s20] sm:$0xff]
        %v2010 = vld [vmem:[%s20 + $0x8] sm:$0xff]
        %v2011 = vld [vmem:[%s20 + $0x10] sm:$0xff]
        %v2012 = vld [vmem:[%s20 + $0x18] sm:$0xff]
        %v2013 = vld [vmem:[%s21] sm:$0x1]
        %v2015 = vrot.slane %v2003, 7
        %v2016 = vsel %vm1121, %v2015, 0
        %2018 = vmatpush.msra.mxu0 0.0
        %2019 = vmatpush.msra.mxu0 0.0
        %2020 = vmatpush.msra.mxu0 0.0
        %2021 = vmatpush.msra.mxu0 0.0
        %2022 = vmatpush.msra.mxu0 0.0
        %2023 = vmatpush.msra.mxu0 0.0
        %2024 = vmatpush.msra.mxu0 0.0
        %2025 = vmatpush.msra.mxu0 0.0
        %2026 = vmatpush.msra.mxu0 0.0
        %2027 = vmatpush.msra.mxu0 0.0
        %2028 = vmatpush.msra.mxu0 0.0
        %2029 = vmatpush.msra.mxu0 0.0
        %2030 = vmatpush.msra.mxu0 %v2012
        %2031 = vmatpush.msra.mxu0 %v2011
        %2032 = vmatpush.msra.mxu0 %v2010
        %2033 = vmatpush.msra.mxu0 %v2009
        %2034 = vmatmul.f32.gmra.mxu0 %v2016
        %v2035 = vpop.f32.mrf.mxu0
        %v2036 = vadd.f32 %v2013, %v2035
        %2037 = vdwg.mxu0
        %v2038 = vmax.f32 %v2036, 0.0
        %v2039 = vld [vmem:[%s22] sm:$0xff]
        %v2040 = vld [vmem:[%s22 + $0x8] sm:$0xff]
        %v2041 = vld [vmem:[#allocation3] sm:$0x1]
        %vm2042 = vcmask 130048
        %v2044 = vsel %vm2042, %v2038, 0
        %2046 = vmatpush.msra.mxu0 0.0
        %2047 = vmatpush.msra.mxu0 0.0
        %2048 = vmatpush.msra.mxu0 0.0
        %2049 = vmatpush.msra.mxu0 0.0
        %2050 = vmatpush.msra.mxu0 0.0
        %2051 = vmatpush.msra.mxu0 0.0
        %2052 = vmatpush.msra.mxu0 0.0
        %2053 = vmatpush.msra.mxu0 0.0
        %2054 = vmatpush.msra.mxu0 0.0
        %2055 = vmatpush.msra.mxu0 0.0
        %2056 = vmatpush.msra.mxu0 0.0
        %2057 = vmatpush.msra.mxu0 0.0
        %2058 = vmatpush.msra.mxu0 0.0
        %2059 = vmatpush.msra.mxu0 0.0
        %2060 = vmatpush.msra.mxu0 %v2040
        %2061 = vmatpush.msra.mxu0 %v2039
        %2062 = vmatmul.f32.gmra.mxu0 %v2044
        %v2063 = vpop.f32.mrf.mxu0
        %v2064 = vadd.f32 %v2041, %v2063
        %2065 = vdwg.mxu0
        %vm2066 = vcmask 0
        %2067 = vst.msk [vmem:[%s1027] sm:$0x1] %vm2066, %v2064
      $region124: #{tpu_custom_call.1} parent=115 // pred_fallthru
        _
      %p2068 = scmp.lt.s32.totalorder %s41, 1
      %s2069 = scalar_select %p2068, %s41, 1
      %s2070 = scalar_lea.vmem %s24, %s2069
      // Predicated region
      $region125: #{tpu_custom_call.1} parent=115 // pred_check
        %p2071 = pneg %p661
      $region126: #{tpu_custom_call.1} parent=115 // pred_check_branch
        %2073 = sbr.rel (%p2071) target = $region128
      $region127: #{tpu_custom_call.1} parent=115 // pred_region
        _
      $region128: #{tpu_custom_call.1} parent=115 // pred_fallthru
        _
    $region116: #{tpu_custom_call.1} parent=5 // pred_fallthru
      _
    %p2074 = scmp.le.s32.totalorder 2, %s32
    // Predicated region
    $region129: #{tpu_custom_call.1} parent=5 // pred_check
      %p2075 = pneg %p2074
    $region130: #{tpu_custom_call.1} parent=5 // pred_check_branch
      %2077 = sbr.rel (%p2075) target = $region132
    $region131: #{tpu_custom_call.1} parent=5 // pred_region
      %s2078 = ssub.s32 %s32, 2
      // Predicated region
      $region133: #{tpu_custom_call.1} parent=131 // pred_check
        %p2079 = pneg %p667
      $region134: #{tpu_custom_call.1} parent=131 // pred_check_branch
        %2081 = sbr.rel (%p2079) target = $region136
      $region135: #{tpu_custom_call.1} parent=131 // pred_region
        %p2082 = scmp.lt.s32.totalorder %s43, 1
        %s2083 = scalar_select %p2082, %s43, 1
        %s2084 = scalar_lea.vmem %s24, %s2083
      $region136: #{tpu_custom_call.1} parent=131 // pred_fallthru
        _
    $region132: #{tpu_custom_call.1} parent=5 // pred_fallthru
      _
  $region6: #{tpu_custom_call.1} parent=0 // loop_footer
    %s36 = sadd.s32 1, %s32
  $region7: #{tpu_custom_call.1} parent=0 // loop_footer_branch
    %31 = sbr.rel target = $region3
  $region8: #{tpu_custom_call.1} parent=0 // loop_exit
    _

</llo_original>
